<compile_context>
chip_gen: v6e
topology: v6e:2x2x1
jax: 0.10.0
libtpu: 0.0.40
codegen_flags: <defaults>
</compile_context>

<pallas_src>
import jax
import jax.numpy as jnp
from jax import lax
from jax.experimental import pallas as pl
from jax.experimental.pallas import tpu as pltpu

# ----------------------------- configuration (small shapes) ------------------
HIDDEN = 32            # hidden_dim (module default 128; small per instructions)
NUM_CLASSES = 3
N_NODES = 128          # nodes per graph-batch (one forward call)
N_GRAPHS = 2           # graphs per graph-batch
N_BATCHES = 2          # independent graph-batches -> "parallel" grid axis
N_EDGES = 256
EMB_DIM = 32
F_EMB = 4 * EMB_DIM                  # 128 concatenated embedding features
F_IN = F_EMB + 8                     # 136 = embeddings + possibility col + 7 zero pad
POOL_PAD = 8                         # pool rows padded to one sublane tile
A_ROWS = N_NODES + 8 + POOL_PAD      # 144 = A_hat + mean row + zero pad + pool rows
W_ALL_ROWS = F_IN + 3 * HIDDEN       # 232 packed weight rows
BN_EPS = 1e-5


# ----------------------------- Pallas kernel ---------------------------------
def tree_gnn_kernel(x_ref, a_ref, w_ref, vec_ref, out_ref):
    # x_ref  : [N, 136]   node features (embeddings | possibility | zeros)
    # a_ref  : [144, N]   rows 0..N-1 = A_hat, row N = colsum(A_hat)/N,
    #                     rows N+1..N+7 = 0, rows N+8..N+15 = padded mean-pool matrix
    # w_ref  : [232, H]   packed weights (w1_pad | w2 | w3 | wfc_pad)
    # vec_ref: [8, H]     packed vectors (g1 be1 g2 be2 g3 be3 bfc_pad 0)
    a_ext = a_ref[0:N_NODES + 8, :]                     # A_hat + mean row (+ zero pad)
    vecs = vec_ref[...]                                 # tiny (1 vreg); value-slice below
    inv_n = jnp.full((1, N_NODES), 1.0 / N_NODES, dtype=jnp.float32)

    def gcn_bn_relu(m, w, gamma, beta):
        # Conv bias omitted: exactly cancelled by BN (training-mode) mean subtraction.
        z_ext = jnp.dot(a_ext, jnp.dot(m, w, preferred_element_type=jnp.float32),
                        preferred_element_type=jnp.float32)           # [N+8, H]
        z = z_ext[0:N_NODES]
        mean = z_ext[N_NODES:N_NODES + 1]                              # E[z] from extra A row
        d = z - mean
        var = jnp.dot(inv_n, d * d, preferred_element_type=jnp.float32)  # centered variance
        return jnp.maximum(d * lax.rsqrt(var + BN_EPS) * gamma + beta, 0.0)

    # Weight slab is sliced at the Ref (zero-cost views, 8-sublane-aligned boundaries).
    h = gcn_bn_relu(x_ref[...], w_ref[0:F_IN, :], vecs[0:1], vecs[1:2])
    h = gcn_bn_relu(h, w_ref[F_IN:F_IN + HIDDEN, :], vecs[2:3], vecs[3:4])
    h = gcn_bn_relu(h, w_ref[F_IN + HIDDEN:F_IN + 2 * HIDDEN, :], vecs[4:5], vecs[5:6])

    # global_mean_pool via packed pool rows, then fc (wfc/bfc zero-padded past NUM_CLASSES)
    pooled = jnp.dot(a_ref[N_NODES + 8:A_ROWS, :], h,
                     preferred_element_type=jnp.float32)               # [8, H]
    logits = jnp.dot(pooled, w_ref[F_IN + 2 * HIDDEN:W_ALL_ROWS, :],
                     preferred_element_type=jnp.float32) + vecs[6:7]
    out_ref[...] = logits                                              # padded [8, H]


def tree_gnn_pallas(x_pad, a_slab, w_all, vec_all):
    b = x_pad.shape[0]
    grid_spec = pltpu.PrefetchScalarGridSpec(
        num_scalar_prefetch=0,
        grid=(b,),
        in_specs=[
            pl.BlockSpec((None, N_NODES, F_IN), lambda i: (i, 0, 0)),
            pl.BlockSpec((None, A_ROWS, N_NODES), lambda i: (i, 0, 0)),
            pl.BlockSpec((W_ALL_ROWS, HIDDEN), lambda i: (0, 0)),   # resident weights
            pl.BlockSpec((8, HIDDEN), lambda i: (0, 0)),
        ],
        out_specs=pl.BlockSpec((None, POOL_PAD, HIDDEN), lambda i: (i, 0, 0)),
    )
    return pl.pallas_call(
        tree_gnn_kernel,
        out_shape=jax.ShapeDtypeStruct((b, POOL_PAD, HIDDEN), jnp.float32),
        grid_spec=grid_spec,
        compiler_params=pltpu.CompilerParams(
            dimension_semantics=("parallel",),       # shards across v7x's 2 TCs
            vmem_limit_bytes=4 << 20,
        ),
    )(x_pad, a_slab, w_all, vec_all)


# ----------------------------- plain-JAX glue --------------------------------
def build_a_slab(edge_index, batch):
    """Per graph-batch: [A_hat (N rows) | colsum(A_hat)/N (1) | zeros (7) | pool_pad (8)]."""
    src, dst = edge_index[0], edge_index[1]
    a = jnp.zeros((N_NODES, N_NODES), jnp.float32).at[dst, src].add(1.0)
    a = a + jnp.eye(N_NODES, dtype=jnp.float32)
    deg = a.sum(axis=1)
    dinv = jnp.where(deg > 0, 1.0 / jnp.sqrt(deg), 0.0)
    a_hat = dinv[:, None] * a * dinv[None, :]
    mean_row = a_hat.sum(axis=0, keepdims=True) / N_NODES   # gives E[z] row of A_ext @ (hW)
    onehot = (batch[None, :] == jnp.arange(N_GRAPHS)[:, None]).astype(jnp.float32)
    pool = onehot / jnp.maximum(onehot.sum(axis=1, keepdims=True), 1.0)
    pool_pad = jnp.pad(pool, ((0, POOL_PAD - N_GRAPHS), (0, 0)))
    a_slab = jnp.concatenate(
        [a_hat, mean_row, jnp.zeros((7, N_NODES), jnp.float32), pool_pad], axis=0)
    return a_slab, a_hat, pool


def init_params(key):
    ks = jax.random.split(key, 12)

    def glorot(k, fan_in, fan_out):
        scale = jnp.sqrt(6.0 / (fan_in + fan_out))
        return jax.random.uniform(k, (fan_in, fan_out), jnp.float32, -scale, scale)

    params = dict(
        w1=glorot(ks[0], 1 + F_EMB, HIDDEN),               # [129, H]; row 0 = possibility
        b1=0.1 * jax.random.normal(ks[8], (1, HIDDEN), jnp.float32),
        g1=jnp.ones((1, HIDDEN), jnp.float32), be1=jnp.zeros((1, HIDDEN), jnp.float32),
        w2=glorot(ks[1], HIDDEN, HIDDEN),
        b2=0.1 * jax.random.normal(ks[9], (1, HIDDEN), jnp.float32),
        g2=jnp.ones((1, HIDDEN), jnp.float32), be2=jnp.zeros((1, HIDDEN), jnp.float32),
        w3=glorot(ks[2], HIDDEN, HIDDEN),
        b3=0.1 * jax.random.normal(ks[10], (1, HIDDEN), jnp.float32),
        g3=jnp.ones((1, HIDDEN), jnp.float32), be3=jnp.zeros((1, HIDDEN), jnp.float32),
        wfc=glorot(ks[3], HIDDEN, NUM_CLASSES),
        bfc=0.1 * jax.random.normal(ks[11], (1, NUM_CLASSES), jnp.float32),
    )
    embs = dict(
        emb0=jax.random.normal(ks[4], (96, EMB_DIM), jnp.float32),
        emb1=jax.random.normal(ks[5], (96, EMB_DIM), jnp.float32),
        emb2=jax.random.normal(ks[6], (96, EMB_DIM), jnp.float32),
        emb5=jax.random.normal(ks[7], (256, EMB_DIM), jnp.float32),
    )
    return params, embs


def pack_params(params):
    """One [232,H] weight slab (w1_pad|w2|w3|wfc_pad) + one [8,H] per-feature slab."""
    w1_emb = params["w1"][1:1 + F_EMB]                         # embedding rows
    w1_poss = params["w1"][0:1]                                # possibility row
    w1_pad = jnp.concatenate(
        [w1_emb, w1_poss, jnp.zeros((F_IN - F_EMB - 1, HIDDEN), jnp.float32)], axis=0)
    wfc_pad = jnp.pad(params["wfc"], ((0, 0), (0, HIDDEN - NUM_CLASSES)))
    bfc_pad = jnp.pad(params["bfc"], ((0, 0), (0, HIDDEN - NUM_CLASSES)))
    w_all = jnp.concatenate([w1_pad, params["w2"], params["w3"], wfc_pad], axis=0)
    assert w_all.shape == (W_ALL_ROWS, HIDDEN)
    vec_all = jnp.concatenate(
        [params["g1"], params["be1"], params["g2"], params["be2"],
         params["g3"], params["be3"], bfc_pad,
         jnp.zeros((1, HIDDEN), jnp.float32)], axis=0)         # [8, H]
    return w_all, vec_all


def reference_forward(x129, a_hat, pool, params):
    """Pure-JAX reference, original structure (nonzero conv biases, two-pass BN), vmapped over B."""
    def single(x, a, p):
        def layer(h, w, b, g, be):
            z = a @ (h @ w) + b
            m = z.mean(0, keepdims=True)
            v = ((z - m) ** 2).mean(0, keepdims=True)
            return jnp.maximum((z - m) / jnp.sqrt(v + BN_EPS) * g + be, 0.0)
        h = layer(x, params["w1"], params["b1"], params["g1"], params["be1"])
        h = layer(h, params["w2"], params["b2"], params["g2"], params["be2"])
        h = layer(h, params["w3"], params["b3"], params["g3"], params["be3"])
        return (p @ h) @ params["wfc"] + params["bfc"]
    return jax.vmap(single)(x129, a_hat, pool)


if __name__ == "__main__":
    key = jax.random.PRNGKey(0)
    k_param, k_poss, k_idx, k_edge = jax.random.split(key, 4)

    params, embs = init_params(k_param)

    # raw node inputs per graph-batch: possibility float + 4 integer embedding indices
    possibility = jax.random.uniform(k_poss, (N_BATCHES, N_NODES, 1), jnp.float32)
    ik = jax.random.split(k_idx, 4)
    d0 = jax.random.randint(ik[0], (N_BATCHES, N_NODES), 0, 96)
    d1 = jax.random.randint(ik[1], (N_BATCHES, N_NODES), 0, 96)
    d2 = jax.random.randint(ik[2], (N_BATCHES, N_NODES), 0, 96)
    d5 = jax.random.randint(ik[3], (N_BATCHES, N_NODES), 0, 256)

    x128 = jnp.concatenate([embs["emb0"][d0], embs["emb1"][d1],
                            embs["emb2"][d2], embs["emb5"][d5]], axis=-1)   # [B,N,128]
    zpad = jnp.zeros((N_BATCHES, N_NODES, F_IN - F_EMB - 1), jnp.float32)
    x_pad = jnp.concatenate([x128, possibility, zpad], axis=-1)             # [B,N,136]
    x129 = jnp.concatenate([possibility, x128], axis=-1)                    # reference layout

    edge_index = jax.random.randint(k_edge, (N_BATCHES, 2, N_EDGES), 0, N_NODES)
    batch_vec = jnp.broadcast_to(
        (jnp.arange(N_NODES) >= (N_NODES // N_GRAPHS)).astype(jnp.int32),
        (N_BATCHES, N_NODES))

    a_slab, a_hat, pool = jax.vmap(build_a_slab)(edge_index, batch_vec)
    w_all, vec_all = pack_params(params)

    out_pad = tree_gnn_pallas(x_pad, a_slab, w_all, vec_all)
    jax.block_until_ready(out_pad)
    out = out_pad[:, :N_GRAPHS, :NUM_CLASSES]

    ref = reference_forward(x129, a_hat, pool, params)
    assert out.shape == (N_BATCHES, N_GRAPHS, NUM_CLASSES)
    assert jnp.allclose(out, ref, atol=5e-4, rtol=5e-4), (out, ref)
    print("KERNEL_OK")
</pallas_src>

<mosaic_0001>
module attributes {stable_mosaic.version = 11 : i64} {
  func.func @tree_gnn_kernel(%arg0: i32, %arg1: memref<1x128x136xf32, #tpu.memory_space<vmem>>, %arg2: memref<1x144x128xf32, #tpu.memory_space<vmem>>, %arg3: memref<232x32xf32, #tpu.memory_space<vmem>>, %arg4: memref<8x32xf32, #tpu.memory_space<vmem>>, %arg5: memref<1x8x32xf32, #tpu.memory_space<vmem>>) attributes {dimension_semantics = [#tpu.dimension_semantics<parallel>], iteration_bounds = array<i64: 2>, scalar_prefetch = 0 : i64, scratch_operands = 0 : i64, tpu.core_type = #tpu.core_type<tc>, window_params = [{transform_indices = @transform_0, window_bounds = array<i64: 1, 128, 136>}, {transform_indices = @transform_1, window_bounds = array<i64: 1, 144, 128>}, {pipeline_mode = #tpu.pipeline_mode<synchronous>, transform_indices = @transform_2, window_bounds = array<i64: 232, 32>}, {pipeline_mode = #tpu.pipeline_mode<synchronous>, transform_indices = @transform_3, window_bounds = array<i64: 8, 32>}, {transform_indices = @transform_4, window_bounds = array<i64: 1, 8, 32>}]} {
    %c0 = arith.constant 0 : index
    %c0_0 = arith.constant 0 : index
    %c0_1 = arith.constant 0 : index
    %0 = vector.load %arg2[%c0, %c0_0, %c0_1] : memref<1x144x128xf32, #tpu.memory_space<vmem>>, vector<1x136x128xf32>
    %1 = vector.shape_cast %0 : vector<1x136x128xf32> to vector<136x128xf32>
    %c0_2 = arith.constant 0 : index
    %c0_3 = arith.constant 0 : index
    %2 = vector.load %arg4[%c0_2, %c0_3] : memref<8x32xf32, #tpu.memory_space<vmem>>, vector<8x32xf32>
    %cst = arith.constant 7.812500e-03 : f32
    %3 = vector.broadcast %cst : f32 to vector<1x128xf32>
    %c0_4 = arith.constant 0 : index
    %c0_5 = arith.constant 0 : index
    %c0_6 = arith.constant 0 : index
    %4 = vector.load %arg1[%c0_4, %c0_5, %c0_6] : memref<1x128x136xf32, #tpu.memory_space<vmem>>, vector<1x128x136xf32>
    %5 = vector.shape_cast %4 : vector<1x128x136xf32> to vector<128x136xf32>
    %c0_7 = arith.constant 0 : index
    %c0_8 = arith.constant 0 : index
    %6 = vector.load %arg3[%c0_7, %c0_8] : memref<232x32xf32, #tpu.memory_space<vmem>>, vector<136x32xf32>
    %7 = vector.extract_strided_slice %2 {offsets = [0, 0], sizes = [1, 32], strides = [1, 1]} : vector<8x32xf32> to vector<1x32xf32>
    %8 = vector.extract_strided_slice %2 {offsets = [1, 0], sizes = [1, 32], strides = [1, 1]} : vector<8x32xf32> to vector<1x32xf32>
    %cst_9 = arith.constant dense<0.000000e+00> : vector<128x32xf32>
    %9 = tpu.matmul %5, %6, %cst_9 {dimension_numbers = #tpu.dot_dimension_numbers<[1], [0], [0], [1], [0, 0, 1, 1], [], []>} : vector<128x136xf32>, vector<136x32xf32>, vector<128x32xf32> -> vector<128x32xf32>
    %cst_10 = arith.constant dense<0.000000e+00> : vector<136x32xf32>
    %10 = tpu.matmul %1, %9, %cst_10 {dimension_numbers = #tpu.dot_dimension_numbers<[1], [0], [0], [1], [0, 0, 1, 1], [], []>} : vector<136x128xf32>, vector<128x32xf32>, vector<136x32xf32> -> vector<136x32xf32>
    %11 = vector.extract_strided_slice %10 {offsets = [0, 0], sizes = [128, 32], strides = [1, 1]} : vector<136x32xf32> to vector<128x32xf32>
    %12 = vector.extract_strided_slice %10 {offsets = [128, 0], sizes = [1, 32], strides = [1, 1]} : vector<136x32xf32> to vector<1x32xf32>
    %13 = vector.broadcast %12 : vector<1x32xf32> to vector<128x32xf32>
    %14 = arith.subf %11, %13 : vector<128x32xf32>
    %15 = arith.mulf %14, %14 : vector<128x32xf32>
    %cst_11 = arith.constant dense<0.000000e+00> : vector<1x32xf32>
    %16 = tpu.matmul %3, %15, %cst_11 {dimension_numbers = #tpu.dot_dimension_numbers<[1], [0], [0], [1], [0, 0, 1, 1], [], []>} : vector<1x128xf32>, vector<128x32xf32>, vector<1x32xf32> -> vector<1x32xf32>
    %cst_12 = arith.constant 9.99999974E-6 : f32
    %17 = vector.broadcast %cst_12 : f32 to vector<1x32xf32>
    %18 = arith.addf %16, %17 : vector<1x32xf32>
    %19 = math.rsqrt %18 : vector<1x32xf32>
    %20 = vector.broadcast %19 : vector<1x32xf32> to vector<128x32xf32>
    %21 = arith.mulf %14, %20 : vector<128x32xf32>
    %22 = vector.broadcast %7 : vector<1x32xf32> to vector<128x32xf32>
    %23 = arith.mulf %21, %22 : vector<128x32xf32>
    %24 = vector.broadcast %8 : vector<1x32xf32> to vector<128x32xf32>
    %25 = arith.addf %23, %24 : vector<128x32xf32>
    %cst_13 = arith.constant 0.000000e+00 : f32
    %26 = vector.broadcast %cst_13 : f32 to vector<128x32xf32>
    %27 = arith.maximumf %25, %26 : vector<128x32xf32>
    %c136 = arith.constant 136 : index
    %c0_14 = arith.constant 0 : index
    %28 = vector.load %arg3[%c136, %c0_14] : memref<232x32xf32, #tpu.memory_space<vmem>>, vector<32x32xf32>
    %29 = vector.extract_strided_slice %2 {offsets = [2, 0], sizes = [1, 32], strides = [1, 1]} : vector<8x32xf32> to vector<1x32xf32>
    %30 = vector.extract_strided_slice %2 {offsets = [3, 0], sizes = [1, 32], strides = [1, 1]} : vector<8x32xf32> to vector<1x32xf32>
    %cst_15 = arith.constant dense<0.000000e+00> : vector<128x32xf32>
    %31 = tpu.matmul %27, %28, %cst_15 {dimension_numbers = #tpu.dot_dimension_numbers<[1], [0], [0], [1], [0, 0, 1, 1], [], []>} : vector<128x32xf32>, vector<32x32xf32>, vector<128x32xf32> -> vector<128x32xf32>
    %cst_16 = arith.constant dense<0.000000e+00> : vector<136x32xf32>
    %32 = tpu.matmul %1, %31, %cst_16 {dimension_numbers = #tpu.dot_dimension_numbers<[1], [0], [0], [1], [0, 0, 1, 1], [], []>} : vector<136x128xf32>, vector<128x32xf32>, vector<136x32xf32> -> vector<136x32xf32>
    %33 = vector.extract_strided_slice %32 {offsets = [0, 0], sizes = [128, 32], strides = [1, 1]} : vector<136x32xf32> to vector<128x32xf32>
    %34 = vector.extract_strided_slice %32 {offsets = [128, 0], sizes = [1, 32], strides = [1, 1]} : vector<136x32xf32> to vector<1x32xf32>
    %35 = vector.broadcast %34 : vector<1x32xf32> to vector<128x32xf32>
    %36 = arith.subf %33, %35 : vector<128x32xf32>
    %37 = arith.mulf %36, %36 : vector<128x32xf32>
    %cst_17 = arith.constant dense<0.000000e+00> : vector<1x32xf32>
    %38 = tpu.matmul %3, %37, %cst_17 {dimension_numbers = #tpu.dot_dimension_numbers<[1], [0], [0], [1], [0, 0, 1, 1], [], []>} : vector<1x128xf32>, vector<128x32xf32>, vector<1x32xf32> -> vector<1x32xf32>
    %cst_18 = arith.constant 9.99999974E-6 : f32
    %39 = vector.broadcast %cst_18 : f32 to vector<1x32xf32>
    %40 = arith.addf %38, %39 : vector<1x32xf32>
    %41 = math.rsqrt %40 : vector<1x32xf32>
    %42 = vector.broadcast %41 : vector<1x32xf32> to vector<128x32xf32>
    %43 = arith.mulf %36, %42 : vector<128x32xf32>
    %44 = vector.broadcast %29 : vector<1x32xf32> to vector<128x32xf32>
    %45 = arith.mulf %43, %44 : vector<128x32xf32>
    %46 = vector.broadcast %30 : vector<1x32xf32> to vector<128x32xf32>
    %47 = arith.addf %45, %46 : vector<128x32xf32>
    %cst_19 = arith.constant 0.000000e+00 : f32
    %48 = vector.broadcast %cst_19 : f32 to vector<128x32xf32>
    %49 = arith.maximumf %47, %48 : vector<128x32xf32>
    %c168 = arith.constant 168 : index
    %c0_20 = arith.constant 0 : index
    %50 = vector.load %arg3[%c168, %c0_20] : memref<232x32xf32, #tpu.memory_space<vmem>>, vector<32x32xf32>
    %51 = vector.extract_strided_slice %2 {offsets = [4, 0], sizes = [1, 32], strides = [1, 1]} : vector<8x32xf32> to vector<1x32xf32>
    %52 = vector.extract_strided_slice %2 {offsets = [5, 0], sizes = [1, 32], strides = [1, 1]} : vector<8x32xf32> to vector<1x32xf32>
    %cst_21 = arith.constant dense<0.000000e+00> : vector<128x32xf32>
    %53 = tpu.matmul %49, %50, %cst_21 {dimension_numbers = #tpu.dot_dimension_numbers<[1], [0], [0], [1], [0, 0, 1, 1], [], []>} : vector<128x32xf32>, vector<32x32xf32>, vector<128x32xf32> -> vector<128x32xf32>
    %cst_22 = arith.constant dense<0.000000e+00> : vector<136x32xf32>
    %54 = tpu.matmul %1, %53, %cst_22 {dimension_numbers = #tpu.dot_dimension_numbers<[1], [0], [0], [1], [0, 0, 1, 1], [], []>} : vector<136x128xf32>, vector<128x32xf32>, vector<136x32xf32> -> vector<136x32xf32>
    %55 = vector.extract_strided_slice %54 {offsets = [0, 0], sizes = [128, 32], strides = [1, 1]} : vector<136x32xf32> to vector<128x32xf32>
    %56 = vector.extract_strided_slice %54 {offsets = [128, 0], sizes = [1, 32], strides = [1, 1]} : vector<136x32xf32> to vector<1x32xf32>
    %57 = vector.broadcast %56 : vector<1x32xf32> to vector<128x32xf32>
    %58 = arith.subf %55, %57 : vector<128x32xf32>
    %59 = arith.mulf %58, %58 : vector<128x32xf32>
    %cst_23 = arith.constant dense<0.000000e+00> : vector<1x32xf32>
    %60 = tpu.matmul %3, %59, %cst_23 {dimension_numbers = #tpu.dot_dimension_numbers<[1], [0], [0], [1], [0, 0, 1, 1], [], []>} : vector<1x128xf32>, vector<128x32xf32>, vector<1x32xf32> -> vector<1x32xf32>
    %cst_24 = arith.constant 9.99999974E-6 : f32
    %61 = vector.broadcast %cst_24 : f32 to vector<1x32xf32>
    %62 = arith.addf %60, %61 : vector<1x32xf32>
    %63 = math.rsqrt %62 : vector<1x32xf32>
    %64 = vector.broadcast %63 : vector<1x32xf32> to vector<128x32xf32>
    %65 = arith.mulf %58, %64 : vector<128x32xf32>
    %66 = vector.broadcast %51 : vector<1x32xf32> to vector<128x32xf32>
    %67 = arith.mulf %65, %66 : vector<128x32xf32>
    %68 = vector.broadcast %52 : vector<1x32xf32> to vector<128x32xf32>
    %69 = arith.addf %67, %68 : vector<128x32xf32>
    %cst_25 = arith.constant 0.000000e+00 : f32
    %70 = vector.broadcast %cst_25 : f32 to vector<128x32xf32>
    %71 = arith.maximumf %69, %70 : vector<128x32xf32>
    %c0_26 = arith.constant 0 : index
    %c136_27 = arith.constant 136 : index
    %c0_28 = arith.constant 0 : index
    %72 = vector.load %arg2[%c0_26, %c136_27, %c0_28] : memref<1x144x128xf32, #tpu.memory_space<vmem>>, vector<1x8x128xf32>
    %73 = vector.shape_cast %72 : vector<1x8x128xf32> to vector<8x128xf32>
    %cst_29 = arith.constant dense<0.000000e+00> : vector<8x32xf32>
    %74 = tpu.matmul %73, %71, %cst_29 {dimension_numbers = #tpu.dot_dimension_numbers<[1], [0], [0], [1], [0, 0, 1, 1], [], []>} : vector<8x128xf32>, vector<128x32xf32>, vector<8x32xf32> -> vector<8x32xf32>
    %c200 = arith.constant 200 : index
    %c0_30 = arith.constant 0 : index
    %75 = vector.load %arg3[%c200, %c0_30] : memref<232x32xf32, #tpu.memory_space<vmem>>, vector<32x32xf32>
    %cst_31 = arith.constant dense<0.000000e+00> : vector<8x32xf32>
    %76 = tpu.matmul %74, %75, %cst_31 {dimension_numbers = #tpu.dot_dimension_numbers<[1], [0], [0], [1], [0, 0, 1, 1], [], []>} : vector<8x32xf32>, vector<32x32xf32>, vector<8x32xf32> -> vector<8x32xf32>
    %77 = vector.extract_strided_slice %2 {offsets = [6, 0], sizes = [1, 32], strides = [1, 1]} : vector<8x32xf32> to vector<1x32xf32>
    %78 = vector.broadcast %77 : vector<1x32xf32> to vector<8x32xf32>
    %79 = arith.addf %76, %78 : vector<8x32xf32>
    %c0_32 = arith.constant 0 : index
    %c0_33 = arith.constant 0 : index
    %c0_34 = arith.constant 0 : index
    %80 = vector.load %arg5[%c0_32, %c0_33, %c0_34] : memref<1x8x32xf32, #tpu.memory_space<vmem>>, vector<1x8x32xf32>
    %81 = vector.shape_cast %80 : vector<1x8x32xf32> to vector<8x32xf32>
    %82 = vector.shape_cast %79 : vector<8x32xf32> to vector<1x8x32xf32>
    tpu.vector_store %arg5[%c0_32, %c0_33, %c0_34], %82 {strides = array<i32>} : memref<1x8x32xf32, #tpu.memory_space<vmem>>, vector<1x8x32xf32>,
    return
  }
  func.func @transform_0(%arg0: i32) -> (i32, i32, i32) {
    %c0_i32 = arith.constant 0 : i32
    %c0_i32_0 = arith.constant 0 : i32
    %c0_i32_1 = arith.constant 0 : i32
    return %arg0, %c0_i32, %c0_i32_0 : i32, i32, i32
  }
  func.func @transform_1(%arg0: i32) -> (i32, i32, i32) {
    %c0_i32 = arith.constant 0 : i32
    %c0_i32_0 = arith.constant 0 : i32
    %c0_i32_1 = arith.constant 0 : i32
    return %arg0, %c0_i32, %c0_i32_0 : i32, i32, i32
  }
  func.func @transform_2(%arg0: i32) -> (i32, i32) {
    %c0_i32 = arith.constant 0 : i32
    %c0_i32_0 = arith.constant 0 : i32
    %c0_i32_1 = arith.constant 0 : i32
    return %c0_i32, %c0_i32_0 : i32, i32
  }
  func.func @transform_3(%arg0: i32) -> (i32, i32) {
    %c0_i32 = arith.constant 0 : i32
    %c0_i32_0 = arith.constant 0 : i32
    %c0_i32_1 = arith.constant 0 : i32
    return %c0_i32, %c0_i32_0 : i32, i32
  }
  func.func @transform_4(%arg0: i32) -> (i32, i32, i32) {
    %c0_i32 = arith.constant 0 : i32
    %c0_i32_0 = arith.constant 0 : i32
    %c0_i32_1 = arith.constant 0 : i32
    return %arg0, %c0_i32, %c0_i32_0 : i32, i32, i32
  }
}

</mosaic_0001>

<llo_original>
// kernel: tpu_custom_call.1
$region0: #{tpu_custom_call.1}
  #allocation0 [shape = 'u32[]', space=smem, size = 0x4, offset = 0x4, fixed_abs, tag = 'smem constant byte address 0x4 - core index']
  #allocation1 [shape = 'u32[144,128]{1,0:T(1,128)}', space=vmem, size = 0x12000, scoped, tag = 'internal scratch']
  %s0 = inlined_call_operand.vmem [shape: f32[2,128,136], index: 0, kind: input, shape index: {}]
  %s1 = inlined_call_operand.vmem [shape: f32[2,144,128], index: 1, kind: input, shape index: {}]
  %s2 = inlined_call_operand.vmem [shape: f32[232,32], index: 2, kind: input, shape index: {}]
  %s3 = inlined_call_operand.vmem [shape: f32[8,32], index: 3, kind: input, shape index: {}]
  %s4 = inlined_call_operand.hbm [shape: f32[2,8,32], index: 4, kind: output, shape index: {}]
  %s5 = sld [smem:[#allocation0]]
  $region49: #{tpu_custom_call.1} parent=0
    _
  %s7 = ssub.s32 1, %s5
  %s8 = scalar_select 0, %s7, %s5
  $region1: #{tpu_custom_call.1} parent=0
    #allocation2 [shape = 'u8[8192]{0}', space=vmem, size = 0x2000, scoped, tag = 'output window, operand 0']
    #allocation3 [shape = 's32[2]{0}', space=sflag, size = 0x8, scoped, tag = 'scoped memory for tpu_custom_call.1']
    %9 = vsyncpa [#allocation3], 0
    %s10 = scalar_lea.sflag [#allocation3], 1
    %11 = vsyncpa %s10, 0
    loop: start=0, step=1, limit=4
    $region2: #{tpu_custom_call.1} parent=1 // loop_pre_header
      _
    $region3: #{tpu_custom_call.1} parent=1 // loop_header
      %s13 = sphi 0, %s17
      %p14 = scmp.ge.s32.totalorder %s13, 4
      %s23 = sphi 0, %s25
      %s26 = sphi 0, %s23
      %s27 = sphi 0, %s26
      %s43 = sphi 0, %s27
      %s49 = sphi 0, %s51
      %s52 = sphi 0, %s49
      %s53 = sphi 0, %s52
      %s69 = sphi 0, %s53
      %s73 = sphi 0, %s73
      %s75 = sphi 0, %s73
      %s76 = sphi 0, %s75
      %s90 = sphi 0, %s76
      %s94 = sphi 0, %s94
      %s96 = sphi 0, %s94
      %s97 = sphi 0, %s96
      %s111 = sphi 0, %s97
      %s117 = sphi 0, %s119
      %s120 = sphi 0, %s117
      %s121 = sphi 0, %s120
      %s137 = sphi 0, %s121
    $region4: #{tpu_custom_call.1} parent=1 // loop_header_branch
      %16 = sbr.rel (%p14) target = $region8
    $region5: #{tpu_custom_call.1} parent=1 // loop_body
      %s18 = ssub.s32 %s13, 1
      %s19 = ssub.s32 %s13, 2
      %s20 = sadd.s32 %s13, 1
      %s21 = ssub.s32 %s13, %s20
      %p22 = scmp.eq.s32.totalorder %s21, 0
      %s24 = sadd.s32 %s23, 1
      %s25 = scalar_select %p22, %s23, %s24
      %p28 = pneg %p22
      %p29 = scmp.eq.s32.totalorder %s13, 1
      %p30 = por %p28, %p29
      %p31 = scmp.ne.s32.totalorder %s23, %s26
      %p32 = scmp.eq.s32.totalorder %s13, 0
      %p33 = por %p31, %p32
      %p34 = scmp.ne.s32.totalorder %s23, %s26
      %p35 = scmp.eq.s32.totalorder %s18, 1
      %p36 = por %p34, %p35
      %p37 = scmp.ne.s32.totalorder %s26, %s27
      %p38 = scmp.eq.s32.totalorder %s18, 0
      %p39 = por %p37, %p38
      %p40 = scmp.ne.s32.totalorder %s26, %s27
      %p41 = scmp.eq.s32.totalorder %s19, 1
      %p42 = por %p40, %p41
      %p44 = scmp.ne.s32.totalorder %s27, %s43
      %p45 = scmp.eq.s32.totalorder %s19, 0
      %p46 = por %p44, %p45
      %s47 = ssub.s32 %s13, %s20
      %p48 = scmp.eq.s32.totalorder %s47, 0
      %s50 = sadd.s32 %s49, 1
      %s51 = scalar_select %p48, %s49, %s50
      %p54 = pneg %p48
      %p55 = scmp.eq.s32.totalorder %s13, 1
      %p56 = por %p54, %p55
      %p57 = scmp.ne.s32.totalorder %s49, %s52
      %p58 = scmp.eq.s32.totalorder %s13, 0
      %p59 = por %p57, %p58
      %p60 = scmp.ne.s32.totalorder %s49, %s52
      %p61 = scmp.eq.s32.totalorder %s18, 1
      %p62 = por %p60, %p61
      %p63 = scmp.ne.s32.totalorder %s52, %s53
      %p64 = scmp.eq.s32.totalorder %s18, 0
      %p65 = por %p63, %p64
      %p66 = scmp.ne.s32.totalorder %s52, %s53
      %p67 = scmp.eq.s32.totalorder %s19, 1
      %p68 = por %p66, %p67
      %p70 = scmp.ne.s32.totalorder %s53, %s69
      %p71 = scmp.eq.s32.totalorder %s19, 0
      %p72 = por %p70, %p71
      %s74 = sadd.s32 %s73, 1
      %p77 = scmp.eq.s32.totalorder %s13, 1
      %p78 = scmp.ne.s32.totalorder %s73, %s75
      %p79 = scmp.eq.s32.totalorder %s13, 0
      %p80 = por %p78, %p79
      %p81 = scmp.ne.s32.totalorder %s73, %s75
      %p82 = scmp.eq.s32.totalorder %s18, 1
      %p83 = por %p81, %p82
      %p84 = scmp.ne.s32.totalorder %s75, %s76
      %p85 = scmp.eq.s32.totalorder %s18, 0
      %p86 = por %p84, %p85
      %p87 = scmp.ne.s32.totalorder %s75, %s76
      %p88 = scmp.eq.s32.totalorder %s19, 1
      %p89 = por %p87, %p88
      %p91 = scmp.ne.s32.totalorder %s76, %s90
      %p92 = scmp.eq.s32.totalorder %s19, 0
      %p93 = por %p91, %p92
      %s95 = sadd.s32 %s94, 1
      %p98 = scmp.eq.s32.totalorder %s13, 1
      %p99 = scmp.ne.s32.totalorder %s94, %s96
      %p100 = scmp.eq.s32.totalorder %s13, 0
      %p101 = por %p99, %p100
      %p102 = scmp.ne.s32.totalorder %s94, %s96
      %p103 = scmp.eq.s32.totalorder %s18, 1
      %p104 = por %p102, %p103
      %p105 = scmp.ne.s32.totalorder %s96, %s97
      %p106 = scmp.eq.s32.totalorder %s18, 0
      %p107 = por %p105, %p106
      %p108 = scmp.ne.s32.totalorder %s96, %s97
      %p109 = scmp.eq.s32.totalorder %s19, 1
      %p110 = por %p108, %p109
      %p112 = scmp.ne.s32.totalorder %s97, %s111
      %p113 = scmp.eq.s32.totalorder %s19, 0
      %p114 = por %p112, %p113
      %s115 = ssub.s32 %s13, %s20
      %p116 = scmp.eq.s32.totalorder %s115, 0
      %s118 = sadd.s32 %s117, 1
      %s119 = scalar_select %p116, %s117, %s118
      %p122 = pneg %p116
      %p123 = scmp.eq.s32.totalorder %s13, 1
      %p124 = por %p122, %p123
      %p125 = scmp.ne.s32.totalorder %s117, %s120
      %p126 = scmp.eq.s32.totalorder %s13, 0
      %p127 = por %p125, %p126
      %p128 = scmp.ne.s32.totalorder %s117, %s120
      %p129 = scmp.eq.s32.totalorder %s18, 1
      %p130 = por %p128, %p129
      %p131 = scmp.ne.s32.totalorder %s120, %s121
      %p132 = scmp.eq.s32.totalorder %s18, 0
      %p133 = por %p131, %p132
      %p134 = scmp.ne.s32.totalorder %s120, %s121
      %p135 = scmp.eq.s32.totalorder %s19, 1
      %p136 = por %p134, %p135
      %p138 = scmp.ne.s32.totalorder %s121, %s137
      %p139 = scmp.eq.s32.totalorder %s19, 0
      %p140 = por %p138, %p139
      %p141 = scmp.le.s32.totalorder 1, %s13
      %p142 = scmp.lt.s32.totalorder %s13, 3
      %p143 = pnand %p141, %p142
      %p144 = pneg %p143
      // Predicated region
      $region9: #{tpu_custom_call.1} parent=5 // pred_check
        _
      $region10: #{tpu_custom_call.1} parent=5 // pred_check_branch
        %146 = sbr.rel (%p143) target = $region12
      $region11: #{tpu_custom_call.1} parent=5 // pred_region
        %s147 = ssub.s32 %s13, 1
        // Predicated region
        $region13: #{tpu_custom_call.1} parent=11 // pred_check
          %p148 = pneg %p86
        $region14: #{tpu_custom_call.1} parent=11 // pred_check_branch
          %150 = sbr.rel (%p148) target = $region16
        $region15: #{tpu_custom_call.1} parent=11 // pred_region
          _
        $region16: #{tpu_custom_call.1} parent=11 // pred_fallthru
          _
        // Predicated region
        $region17: #{tpu_custom_call.1} parent=11 // pred_check
          %p151 = pneg %p107
        $region18: #{tpu_custom_call.1} parent=11 // pred_check_branch
          %153 = sbr.rel (%p151) target = $region20
        $region19: #{tpu_custom_call.1} parent=11 // pred_region
          _
        $region20: #{tpu_custom_call.1} parent=11 // pred_fallthru
          _
      $region12: #{tpu_custom_call.1} parent=5 // pred_fallthru
        _
      %p154 = scmp.lt.s32.totalorder %s13, 2
      // Predicated region
      $region21: #{tpu_custom_call.1} parent=5 // pred_check
        %p155 = pneg %p154
      $region22: #{tpu_custom_call.1} parent=5 // pred_check_branch
        %157 = sbr.rel (%p155) target = $region24
      $region23: #{tpu_custom_call.1} parent=5 // pred_region
        // Predicated region
        $region25: #{tpu_custom_call.1} parent=23 // pred_check
          %p158 = pneg %p33
        $region26: #{tpu_custom_call.1} parent=23 // pred_check_branch
          %160 = sbr.rel (%p158) target = $region28
        $region27: #{tpu_custom_call.1} parent=23 // pred_region
          %p161 = scmp.lt.s32.totalorder %s13, 1
          %s162 = scalar_select %p161, %s13, 1
          %s163 = smul.addr %s162, 32
          %s164 = smul.addr %s163, 8
          %s165 = scalar_lea.vmem %s0, %s164
        $region28: #{tpu_custom_call.1} parent=23 // pred_fallthru
          _
        // Predicated region
        $region29: #{tpu_custom_call.1} parent=23 // pred_check
          %p166 = pneg %p59
        $region30: #{tpu_custom_call.1} parent=23 // pred_check_branch
          %168 = sbr.rel (%p166) target = $region32
        $region31: #{tpu_custom_call.1} parent=23 // pred_region
          %p169 = scmp.lt.s32.totalorder %s13, 1
          %s170 = scalar_select %p169, %s13, 1
          %s171 = smul.addr %s170, 18
          %s172 = smul.addr %s171, 8
          %s173 = scalar_lea.vmem %s1, %s172
        $region32: #{tpu_custom_call.1} parent=23 // pred_fallthru
          _
      $region24: #{tpu_custom_call.1} parent=5 // pred_fallthru
        _
      %p174 = scmp.le.s32.totalorder 1, %s13
      %p175 = scmp.lt.s32.totalorder %s13, 3
      %p176 = pnand %p174, %p175
      %p177 = pneg %p176
      // Predicated region
      $region33: #{tpu_custom_call.1} parent=5 // pred_check
        _
      $region34: #{tpu_custom_call.1} parent=5 // pred_check_branch
        %179 = sbr.rel (%p176) target = $region36
      $region35: #{tpu_custom_call.1} parent=5 // pred_region
        %s180 = ssub.s32 %s13, 1
        %p181 = scmp.lt.s32.totalorder %s18, 1
        %s182 = scalar_select %p181, %s18, 1
        %s183 = smul.addr %s182, 32
        %s184 = smul.addr %s183, 8
        %s185 = scalar_lea.vmem %s0, %s184
        %p186 = pneg %p39
        %p187 = pneg %p36
        %p188 = scmp.lt.s32.totalorder %s18, 1
        %s189 = scalar_select %p188, %s18, 1
        %s190 = smul.addr %s189, 18
        %s191 = smul.addr %s190, 8
        %s192 = scalar_lea.vmem %s1, %s191
        %p193 = pneg %p65
        %p194 = pneg %p62
        %p195 = pneg %p86
        %p196 = pneg %p83
        %p197 = pneg %p107
        %p198 = pneg %p104
        %p199 = pneg %p133
        %p200 = pneg %p130
        %s201 = sand.u32 %s120, 1
        %s202 = scalar_lea.sflag [#allocation3], %s201
        %s203 = sand.u32 %s120, 1
        %s204 = smul.addr %s203, 8
        %s205 = scalar_lea.vmem [#allocation2], %s204
        %p206 = scmp.lt.s32.totalorder %s18, 1
        %s207 = scalar_select %p206, %s18, 1
        %s208 = smul.addr %s207, 32
        %s209 = smul.addr %s208, 8
        %s210 = scalar_lea.vmem %s0, %s209
        %p211 = scmp.lt.s32.totalorder %s18, 1
        %s212 = scalar_select %p211, %s18, 1
        %s213 = smul.addr %s212, 18
        %s214 = smul.addr %s213, 8
        %s215 = scalar_lea.vmem %s1, %s214
        %v216 = vld [vmem:[%s215] sm:$0xff]
        %v217 = vld [vmem:[%s215 + $0x8] sm:$0xff]
        %v218 = vld [vmem:[%s215 + $0x10] sm:$0xff]
        %v219 = vld [vmem:[%s215 + $0x18] sm:$0xff]
        %v220 = vld [vmem:[%s215 + $0x20] sm:$0xff]
        %v221 = vld [vmem:[%s215 + $0x28] sm:$0xff]
        %v222 = vld [vmem:[%s215 + $0x30] sm:$0xff]
        %v223 = vld [vmem:[%s215 + $0x38] sm:$0xff]
        %v224 = vld [vmem:[%s215 + $0x40] sm:$0xff]
        %v225 = vld [vmem:[%s215 + $0x48] sm:$0xff]
        %v226 = vld [vmem:[%s215 + $0x50] sm:$0xff]
        %v227 = vld [vmem:[%s215 + $0x58] sm:$0xff]
        %v228 = vld [vmem:[%s215 + $0x60] sm:$0xff]
        %v229 = vld [vmem:[%s215 + $0x68] sm:$0xff]
        %v230 = vld [vmem:[%s215 + $0x70] sm:$0xff]
        %v231 = vld [vmem:[%s215 + $0x78] sm:$0xff]
        %v232 = vld [vmem:[%s215 + $0x80] sm:$0xff]
        %v233 = vld [vmem:[%s3] sm:$0xff]
        %v234 = vld [vmem:[%s210] sm:$0xff]
        %v235 = vld [vmem:[%s210 + $0x8] sm:$0xff]
        %v236 = vld [vmem:[%s210 + $0x10] sm:$0xff]
        %v237 = vld [vmem:[%s210 + $0x18] sm:$0xff]
        %v238 = vld [vmem:[%s210 + $0x20] sm:$0xff]
        %v239 = vld [vmem:[%s210 + $0x28] sm:$0xff]
        %v240 = vld [vmem:[%s210 + $0x30] sm:$0xff]
        %v241 = vld [vmem:[%s210 + $0x38] sm:$0xff]
        %v242 = vld [vmem:[%s210 + $0x40] sm:$0xff]
        %v243 = vld [vmem:[%s210 + $0x48] sm:$0xff]
        %v244 = vld [vmem:[%s210 + $0x50] sm:$0xff]
        %v245 = vld [vmem:[%s210 + $0x58] sm:$0xff]
        %v246 = vld [vmem:[%s210 + $0x60] sm:$0xff]
        %v247 = vld [vmem:[%s210 + $0x68] sm:$0xff]
        %v248 = vld [vmem:[%s210 + $0x70] sm:$0xff]
        %v249 = vld [vmem:[%s210 + $0x78] sm:$0xff]
        %v250 = vld [vmem:[%s210 + $0x80] sm:$0xff]
        %v251 = vld [vmem:[%s210 + $0x88] sm:$0xff]
        %v252 = vld [vmem:[%s210 + $0x90] sm:$0xff]
        %v253 = vld [vmem:[%s210 + $0x98] sm:$0xff]
        %v254 = vld [vmem:[%s210 + $0xa0] sm:$0xff]
        %v255 = vld [vmem:[%s210 + $0xa8] sm:$0xff]
        %v256 = vld [vmem:[%s210 + $0xb0] sm:$0xff]
        %v257 = vld [vmem:[%s210 + $0xb8] sm:$0xff]
        %v258 = vld [vmem:[%s210 + $0xc0] sm:$0xff]
        %v259 = vld [vmem:[%s210 + $0xc8] sm:$0xff]
        %v260 = vld [vmem:[%s210 + $0xd0] sm:$0xff]
        %v261 = vld [vmem:[%s210 + $0xd8] sm:$0xff]
        %v262 = vld [vmem:[%s210 + $0xe0] sm:$0xff]
        %v263 = vld [vmem:[%s210 + $0xe8] sm:$0xff]
        %v264 = vld [vmem:[%s210 + $0xf0] sm:$0xff]
        %v265 = vld [vmem:[%s210 + $0xf8] sm:$0xff]
        %v266 = vld [vmem:[%s2] sm:$0xff]
        %v267 = vld [vmem:[%s2 + $0x8] sm:$0xff]
        %v268 = vld [vmem:[%s2 + $0x10] sm:$0xff]
        %v269 = vld [vmem:[%s2 + $0x18] sm:$0xff]
        %v270 = vld [vmem:[%s2 + $0x20] sm:$0xff]
        %v271 = vld [vmem:[%s2 + $0x28] sm:$0xff]
        %v272 = vld [vmem:[%s2 + $0x30] sm:$0xff]
        %v273 = vld [vmem:[%s2 + $0x38] sm:$0xff]
        %v274 = vld [vmem:[%s2 + $0x40] sm:$0xff]
        %v275 = vld [vmem:[%s2 + $0x48] sm:$0xff]
        %v276 = vld [vmem:[%s2 + $0x50] sm:$0xff]
        %v277 = vld [vmem:[%s2 + $0x58] sm:$0xff]
        %v278 = vld [vmem:[%s2 + $0x60] sm:$0xff]
        %v279 = vld [vmem:[%s2 + $0x68] sm:$0xff]
        %v280 = vld [vmem:[%s2 + $0x70] sm:$0xff]
        %v281 = vld [vmem:[%s2 + $0x78] sm:$0xff]
        %v282 = vld [vmem:[%s2 + $0x80] sm:$0xff]
        %vm283 = vcmask 64512
        %v285 = vsel %vm283, %v235, 0
        %v288 = vsel %vm283, %v237, 0
        %v291 = vsel %vm283, %v239, 0
        %v294 = vsel %vm283, %v241, 0
        %v297 = vsel %vm283, %v243, 0
        %v300 = vsel %vm283, %v245, 0
        %v303 = vsel %vm283, %v247, 0
        %v306 = vsel %vm283, %v249, 0
        %v309 = vsel %vm283, %v251, 0
        %v312 = vsel %vm283, %v253, 0
        %v315 = vsel %vm283, %v255, 0
        %v318 = vsel %vm283, %v257, 0
        %v321 = vsel %vm283, %v259, 0
        %v324 = vsel %vm283, %v261, 0
        %v327 = vsel %vm283, %v263, 0
        %v330 = vsel %vm283, %v265, 0
        %332 = vmatprep.subr.mxu0 0.0
        %333 = vmatpush1.msra.mxu0 %v281
        %334 = vmatprep.subr.mxu0 0.0
        %335 = vmatpush1.msra.mxu0 %v280
        %336 = vmatprep.subr.mxu0 0.0
        %337 = vmatpush1.msra.mxu0 %v279
        %338 = vmatprep.subr.mxu0 0.0
        %339 = vmatpush1.msra.mxu0 %v278
        %340 = vmatprep.subr.mxu0 0.0
        %341 = vmatpush1.msra.mxu0 %v277
        %342 = vmatprep.subr.mxu0 0.0
        %343 = vmatpush1.msra.mxu0 %v276
        %344 = vmatprep.subr.mxu0 0.0
        %345 = vmatpush1.msra.mxu0 %v275
        %346 = vmatprep.subr.mxu0 0.0
        %347 = vmatpush1.msra.mxu0 %v274
        %348 = vmatprep.subr.mxu0 0.0
        %349 = vmatpush1.msra.mxu0 %v273
        %350 = vmatprep.subr.mxu0 0.0
        %351 = vmatpush1.msra.mxu0 %v272
        %352 = vmatprep.subr.mxu0 0.0
        %353 = vmatpush1.msra.mxu0 %v271
        %354 = vmatprep.subr.mxu0 0.0
        %355 = vmatpush1.msra.mxu0 %v270
        %356 = vmatprep.subr.mxu0 0.0
        %357 = vmatpush1.msra.mxu0 %v269
        %358 = vmatprep.subr.mxu0 0.0
        %359 = vmatpush1.msra.mxu0 %v268
        %360 = vmatprep.subr.mxu0 0.0
        %361 = vmatpush1.msra.mxu0 %v267
        %362 = vmatprep.subr.mxu0 0.0
        %363 = vmatpush1.msra.mxu0 %v266
        %364 = vmatprep.subr.mxu0 0.0
        %365 = vmatpush2.msra.mxu0 0.0
        %366 = vmatprep.subr.mxu0 0.0
        %367 = vmatpush2.msra.mxu0 0.0
        %368 = vmatprep.subr.mxu0 0.0
        %369 = vmatpush2.msra.mxu0 0.0
        %370 = vmatprep.subr.mxu0 0.0
        %371 = vmatpush2.msra.mxu0 0.0
        %372 = vmatprep.subr.mxu0 0.0
        %373 = vmatpush2.msra.mxu0 0.0
        %374 = vmatprep.subr.mxu0 0.0
        %375 = vmatpush2.msra.mxu0 0.0
        %376 = vmatprep.subr.mxu0 0.0
        %377 = vmatpush2.msra.mxu0 0.0
        %378 = vmatprep.subr.mxu0 0.0
        %379 = vmatpush2.msra.mxu0 0.0
        %380 = vmatprep.subr.mxu0 0.0
        %381 = vmatpush2.msra.mxu0 0.0
        %382 = vmatprep.subr.mxu0 0.0
        %383 = vmatpush2.msra.mxu0 0.0
        %384 = vmatprep.subr.mxu0 0.0
        %385 = vmatpush2.msra.mxu0 0.0
        %386 = vmatprep.subr.mxu0 0.0
        %387 = vmatpush2.msra.mxu0 0.0
        %388 = vmatprep.subr.mxu0 0.0
        %389 = vmatpush2.msra.mxu0 0.0
        %390 = vmatprep.subr.mxu0 0.0
        %391 = vmatpush2.msra.mxu0 0.0
        %392 = vmatprep.subr.mxu0 0.0
        %393 = vmatpush2.msra.mxu0 0.0
        %394 = vmatprep.subr.mxu0 0.0
        %395 = vmatpush2.msra.mxu0 %v282
        %396 = vmatprep.mubr.f32.mxu0 %v285
        %397 = vmatmul.mubr.f32.gmra.mxu0 %v234
        %v398 = vpop.f32.mrf.mxu0
        %v399 = vadd.f32 0.0, %v398
        %v400 = vpop.f32.mrf.mxu0
        %401 = vmatprep.mubr.f32.mxu0 %v288
        %402 = vmatmul.mubr.f32.gmra.mxu0 %v236
        %v403 = vpop.f32.mrf.mxu0
        %v404 = vadd.f32 0.0, %v403
        %v405 = vpop.f32.mrf.mxu0
        %406 = vmatprep.mubr.f32.mxu0 %v291
        %407 = vmatmul.mubr.f32.gmra.mxu0 %v238
        %v408 = vpop.f32.mrf.mxu0
        %v409 = vadd.f32 0.0, %v408
        %v410 = vpop.f32.mrf.mxu0
        %411 = vmatprep.mubr.f32.mxu0 %v294
        %412 = vmatmul.mubr.f32.gmra.mxu0 %v240
        %v413 = vpop.f32.mrf.mxu0
        %v414 = vadd.f32 0.0, %v413
        %v415 = vpop.f32.mrf.mxu0
        %416 = vmatprep.mubr.f32.mxu0 %v297
        %417 = vmatmul.mubr.f32.gmra.mxu0 %v242
        %v418 = vpop.f32.mrf.mxu0
        %v419 = vadd.f32 0.0, %v418
        %v420 = vpop.f32.mrf.mxu0
        %421 = vmatprep.mubr.f32.mxu0 %v300
        %422 = vmatmul.mubr.f32.gmra.mxu0 %v244
        %v423 = vpop.f32.mrf.mxu0
        %v424 = vadd.f32 0.0, %v423
        %v425 = vpop.f32.mrf.mxu0
        %426 = vmatprep.mubr.f32.mxu0 %v303
        %427 = vmatmul.mubr.f32.gmra.mxu0 %v246
        %v428 = vpop.f32.mrf.mxu0
        %v429 = vadd.f32 0.0, %v428
        %v430 = vpop.f32.mrf.mxu0
        %431 = vmatprep.mubr.f32.mxu0 %v306
        %432 = vmatmul.mubr.f32.gmra.mxu0 %v248
        %v433 = vpop.f32.mrf.mxu0
        %v434 = vadd.f32 0.0, %v433
        %v435 = vpop.f32.mrf.mxu0
        %436 = vmatprep.mubr.f32.mxu0 %v309
        %437 = vmatmul.mubr.f32.gmra.mxu0 %v250
        %v438 = vpop.f32.mrf.mxu0
        %v439 = vadd.f32 0.0, %v438
        %v440 = vpop.f32.mrf.mxu0
        %441 = vmatprep.mubr.f32.mxu0 %v312
        %442 = vmatmul.mubr.f32.gmra.mxu0 %v252
        %v443 = vpop.f32.mrf.mxu0
        %v444 = vadd.f32 0.0, %v443
        %v445 = vpop.f32.mrf.mxu0
        %446 = vmatprep.mubr.f32.mxu0 %v315
        %447 = vmatmul.mubr.f32.gmra.mxu0 %v254
        %v448 = vpop.f32.mrf.mxu0
        %v449 = vadd.f32 0.0, %v448
        %v450 = vpop.f32.mrf.mxu0
        %451 = vmatprep.mubr.f32.mxu0 %v318
        %452 = vmatmul.mubr.f32.gmra.mxu0 %v256
        %v453 = vpop.f32.mrf.mxu0
        %v454 = vadd.f32 0.0, %v453
        %v455 = vpop.f32.mrf.mxu0
        %456 = vmatprep.mubr.f32.mxu0 %v321
        %457 = vmatmul.mubr.f32.gmra.mxu0 %v258
        %v458 = vpop.f32.mrf.mxu0
        %v459 = vadd.f32 0.0, %v458
        %v460 = vpop.f32.mrf.mxu0
        %461 = vmatprep.mubr.f32.mxu0 %v324
        %462 = vmatmul.mubr.f32.gmra.mxu0 %v260
        %v463 = vpop.f32.mrf.mxu0
        %v464 = vadd.f32 0.0, %v463
        %v465 = vpop.f32.mrf.mxu0
        %466 = vmatprep.mubr.f32.mxu0 %v327
        %467 = vmatmul.mubr.f32.gmra.mxu0 %v262
        %v468 = vpop.f32.mrf.mxu0
        %v469 = vadd.f32 0.0, %v468
        %v470 = vpop.f32.mrf.mxu0
        %471 = vmatprep.mubr.f32.mxu0 %v330
        %472 = vmatmul.mubr.f32.gmra.mxu0 %v264
        %v473 = vpop.f32.mrf.mxu0
        %v474 = vadd.f32 0.0, %v473
        %v475 = vpop.f32.mrf.mxu0
        %476 = vdwg.mxu0
        %477 = vmatprep.subr.mxu0 0.0
        %478 = vmatpush1.msra.mxu0 %v474
        %479 = vmatprep.subr.mxu0 0.0
        %480 = vmatpush1.msra.mxu0 %v469
        %481 = vmatprep.subr.mxu0 0.0
        %482 = vmatpush1.msra.mxu0 %v464
        %483 = vmatprep.subr.mxu0 0.0
        %484 = vmatpush1.msra.mxu0 %v459
        %485 = vmatprep.subr.mxu0 0.0
        %486 = vmatpush1.msra.mxu0 %v454
        %487 = vmatprep.subr.mxu0 0.0
        %488 = vmatpush1.msra.mxu0 %v449
        %489 = vmatprep.subr.mxu0 0.0
        %490 = vmatpush1.msra.mxu0 %v444
        %491 = vmatprep.subr.mxu0 0.0
        %492 = vmatpush1.msra.mxu0 %v439
        %493 = vmatprep.subr.mxu0 0.0
        %494 = vmatpush1.msra.mxu0 %v434
        %495 = vmatprep.subr.mxu0 0.0
        %496 = vmatpush1.msra.mxu0 %v429
        %497 = vmatprep.subr.mxu0 0.0
        %498 = vmatpush1.msra.mxu0 %v424
        %499 = vmatprep.subr.mxu0 0.0
        %500 = vmatpush1.msra.mxu0 %v419
        %501 = vmatprep.subr.mxu0 0.0
        %502 = vmatpush1.msra.mxu0 %v414
        %503 = vmatprep.subr.mxu0 0.0
        %504 = vmatpush1.msra.mxu0 %v409
        %505 = vmatprep.subr.mxu0 0.0
        %506 = vmatpush1.msra.mxu0 %v404
        %507 = vmatprep.subr.mxu0 0.0
        %508 = vmatpush1.msra.mxu0 %v399
        %509 = vmatprep.subr.mxu0 0.0
        %510 = vmatpush2.msra.mxu0 0.0
        %511 = vmatprep.subr.mxu0 0.0
        %512 = vmatpush2.msra.mxu0 0.0
        %513 = vmatprep.subr.mxu0 0.0
        %514 = vmatpush2.msra.mxu0 0.0
        %515 = vmatprep.subr.mxu0 0.0
        %516 = vmatpush2.msra.mxu0 0.0
        %517 = vmatprep.subr.mxu0 0.0
        %518 = vmatpush2.msra.mxu0 0.0
        %519 = vmatprep.subr.mxu0 0.0
        %520 = vmatpush2.msra.mxu0 0.0
        %521 = vmatprep.subr.mxu0 0.0
        %522 = vmatpush2.msra.mxu0 0.0
        %523 = vmatprep.subr.mxu0 0.0
        %524 = vmatpush2.msra.mxu0 0.0
        %525 = vmatprep.subr.mxu0 0.0
        %526 = vmatpush2.msra.mxu0 0.0
        %527 = vmatprep.subr.mxu0 0.0
        %528 = vmatpush2.msra.mxu0 0.0
        %529 = vmatprep.subr.mxu0 0.0
        %530 = vmatpush2.msra.mxu0 0.0
        %531 = vmatprep.subr.mxu0 0.0
        %532 = vmatpush2.msra.mxu0 0.0
        %533 = vmatprep.subr.mxu0 0.0
        %534 = vmatpush2.msra.mxu0 0.0
        %535 = vmatprep.subr.mxu0 0.0
        %536 = vmatpush2.msra.mxu0 0.0
        %537 = vmatprep.subr.mxu0 0.0
        %538 = vmatpush2.msra.mxu0 0.0
        %539 = vmatprep.subr.mxu0 0.0
        %540 = vmatpush2.msra.mxu0 0.0
        %541 = vmatprep.mubr.f32.mxu0 0.0
        %542 = vmatmul.mubr.f32.gmra.mxu0 %v216
        %v543 = vpop.f32.mrf.mxu0
        %v544 = vadd.f32 0.0, %v543
        %v545 = vpop.f32.mrf.mxu0
        %546 = vmatprep.mubr.f32.mxu0 0.0
        %547 = vmatmul.mubr.f32.gmra.mxu0 %v217
        %v548 = vpop.f32.mrf.mxu0
        %v549 = vadd.f32 0.0, %v548
        %v550 = vpop.f32.mrf.mxu0
        %551 = vmatprep.mubr.f32.mxu0 0.0
        %552 = vmatmul.mubr.f32.gmra.mxu0 %v218
        %v553 = vpop.f32.mrf.mxu0
        %v554 = vadd.f32 0.0, %v553
        %v555 = vpop.f32.mrf.mxu0
        %556 = vmatprep.mubr.f32.mxu0 0.0
        %557 = vmatmul.mubr.f32.gmra.mxu0 %v219
        %v558 = vpop.f32.mrf.mxu0
        %v559 = vadd.f32 0.0, %v558
        %v560 = vpop.f32.mrf.mxu0
        %561 = vmatprep.mubr.f32.mxu0 0.0
        %562 = vmatmul.mubr.f32.gmra.mxu0 %v220
        %v563 = vpop.f32.mrf.mxu0
        %v564 = vadd.f32 0.0, %v563
        %v565 = vpop.f32.mrf.mxu0
        %566 = vmatprep.mubr.f32.mxu0 0.0
        %567 = vmatmul.mubr.f32.gmra.mxu0 %v221
        %v568 = vpop.f32.mrf.mxu0
        %v569 = vadd.f32 0.0, %v568
        %v570 = vpop.f32.mrf.mxu0
        %571 = vmatprep.mubr.f32.mxu0 0.0
        %572 = vmatmul.mubr.f32.gmra.mxu0 %v222
        %v573 = vpop.f32.mrf.mxu0
        %v574 = vadd.f32 0.0, %v573
        %v575 = vpop.f32.mrf.mxu0
        %576 = vmatprep.mubr.f32.mxu0 0.0
        %577 = vmatmul.mubr.f32.gmra.mxu0 %v223
        %v578 = vpop.f32.mrf.mxu0
        %v579 = vadd.f32 0.0, %v578
        %v580 = vpop.f32.mrf.mxu0
        %581 = vmatprep.mubr.f32.mxu0 0.0
        %582 = vmatmul.mubr.f32.gmra.mxu0 %v224
        %v583 = vpop.f32.mrf.mxu0
        %v584 = vadd.f32 0.0, %v583
        %v585 = vpop.f32.mrf.mxu0
        %586 = vmatprep.mubr.f32.mxu0 0.0
        %587 = vmatmul.mubr.f32.gmra.mxu0 %v225
        %v588 = vpop.f32.mrf.mxu0
        %v589 = vadd.f32 0.0, %v588
        %v590 = vpop.f32.mrf.mxu0
        %591 = vmatprep.mubr.f32.mxu0 0.0
        %592 = vmatmul.mubr.f32.gmra.mxu0 %v226
        %v593 = vpop.f32.mrf.mxu0
        %v594 = vadd.f32 0.0, %v593
        %v595 = vpop.f32.mrf.mxu0
        %596 = vmatprep.mubr.f32.mxu0 0.0
        %597 = vmatmul.mubr.f32.gmra.mxu0 %v227
        %v598 = vpop.f32.mrf.mxu0
        %v599 = vadd.f32 0.0, %v598
        %v600 = vpop.f32.mrf.mxu0
        %601 = vmatprep.mubr.f32.mxu0 0.0
        %602 = vmatmul.mubr.f32.gmra.mxu0 %v228
        %v603 = vpop.f32.mrf.mxu0
        %v604 = vadd.f32 0.0, %v603
        %v605 = vpop.f32.mrf.mxu0
        %606 = vmatprep.mubr.f32.mxu0 0.0
        %607 = vmatmul.mubr.f32.gmra.mxu0 %v229
        %v608 = vpop.f32.mrf.mxu0
        %v609 = vadd.f32 0.0, %v608
        %v610 = vpop.f32.mrf.mxu0
        %611 = vmatprep.mubr.f32.mxu0 0.0
        %612 = vmatmul.mubr.f32.gmra.mxu0 %v230
        %v613 = vpop.f32.mrf.mxu0
        %v614 = vadd.f32 0.0, %v613
        %v615 = vpop.f32.mrf.mxu0
        %616 = vmatprep.mubr.f32.mxu0 0.0
        %617 = vmatmul.mubr.f32.gmra.mxu0 %v231
        %v618 = vpop.f32.mrf.mxu0
        %v619 = vadd.f32 0.0, %v618
        %v620 = vpop.f32.mrf.mxu0
        %621 = vmatprep.mubr.f32.mxu0 0.0
        %622 = vmatmul.mubr.f32.gmra.mxu0 %v232
        %v623 = vpop.f32.mrf.mxu0
        %v624 = vadd.f32 0.0, %v623
        %v625 = vpop.f32.mrf.mxu0
        %626 = vdwg.mxu0
        %v627 = vlaneseq
        %v628 = vshrl.u32 %v627, 7
        %v629 = vsub.s32 0, %v628
        %v630 = vrot.slane %v624, %v629
        %v631 = vsub.f32 %v544, %v630
        %v632 = vsub.f32 %v549, %v630
        %v633 = vsub.f32 %v554, %v630
        %v634 = vsub.f32 %v559, %v630
        %v635 = vsub.f32 %v564, %v630
        %v636 = vsub.f32 %v569, %v630
        %v637 = vsub.f32 %v574, %v630
        %v638 = vsub.f32 %v579, %v630
        %v639 = vsub.f32 %v584, %v630
        %v640 = vsub.f32 %v589, %v630
        %v641 = vsub.f32 %v594, %v630
        %v642 = vsub.f32 %v599, %v630
        %v643 = vsub.f32 %v604, %v630
        %v644 = vsub.f32 %v609, %v630
        %v645 = vsub.f32 %v614, %v630
        %v646 = vsub.f32 %v619, %v630
        %v647 = vmul.f32 %v631, %v631
        %v648 = vmul.f32 %v632, %v632
        %v649 = vmul.f32 %v633, %v633
        %v650 = vmul.f32 %v634, %v634
        %v651 = vmul.f32 %v635, %v635
        %v652 = vmul.f32 %v636, %v636
        %v653 = vmul.f32 %v637, %v637
        %v654 = vmul.f32 %v638, %v638
        %v655 = vmul.f32 %v639, %v639
        %v656 = vmul.f32 %v640, %v640
        %v657 = vmul.f32 %v641, %v641
        %v658 = vmul.f32 %v642, %v642
        %v659 = vmul.f32 %v643, %v643
        %v660 = vmul.f32 %v644, %v644
        %v661 = vmul.f32 %v645, %v645
        %v662 = vmul.f32 %v646, %v646
        %663 = vmatprep.subr.mxu0 0.0
        %664 = vmatpush1.msra.mxu0 %v662
        %665 = vmatprep.subr.mxu0 0.0
        %666 = vmatpush1.msra.mxu0 %v661
        %667 = vmatprep.subr.mxu0 0.0
        %668 = vmatpush1.msra.mxu0 %v660
        %669 = vmatprep.subr.mxu0 0.0
        %670 = vmatpush1.msra.mxu0 %v659
        %671 = vmatprep.subr.mxu0 0.0
        %672 = vmatpush1.msra.mxu0 %v658
        %673 = vmatprep.subr.mxu0 0.0
        %674 = vmatpush1.msra.mxu0 %v657
        %675 = vmatprep.subr.mxu0 0.0
        %676 = vmatpush1.msra.mxu0 %v656
        %677 = vmatprep.subr.mxu0 0.0
        %678 = vmatpush1.msra.mxu0 %v655
        %679 = vmatprep.subr.mxu0 0.0
        %680 = vmatpush1.msra.mxu0 %v654
        %681 = vmatprep.subr.mxu0 0.0
        %682 = vmatpush1.msra.mxu0 %v653
        %683 = vmatprep.subr.mxu0 0.0
        %684 = vmatpush1.msra.mxu0 %v652
        %685 = vmatprep.subr.mxu0 0.0
        %686 = vmatpush1.msra.mxu0 %v651
        %687 = vmatprep.subr.mxu0 0.0
        %688 = vmatpush1.msra.mxu0 %v650
        %689 = vmatprep.subr.mxu0 0.0
        %690 = vmatpush1.msra.mxu0 %v649
        %691 = vmatprep.subr.mxu0 0.0
        %692 = vmatpush1.msra.mxu0 %v648
        %693 = vmatprep.subr.mxu0 0.0
        %694 = vmatpush1.msra.mxu0 %v647
        %695 = vmatprep.subr.mxu0 0.0
        %696 = vmatpush2.msra.mxu0 0.0
        %697 = vmatprep.subr.mxu0 0.0
        %698 = vmatpush2.msra.mxu0 0.0
        %699 = vmatprep.subr.mxu0 0.0
        %700 = vmatpush2.msra.mxu0 0.0
        %701 = vmatprep.subr.mxu0 0.0
        %702 = vmatpush2.msra.mxu0 0.0
        %703 = vmatprep.subr.mxu0 0.0
        %704 = vmatpush2.msra.mxu0 0.0
        %705 = vmatprep.subr.mxu0 0.0
        %706 = vmatpush2.msra.mxu0 0.0
        %707 = vmatprep.subr.mxu0 0.0
        %708 = vmatpush2.msra.mxu0 0.0
        %709 = vmatprep.subr.mxu0 0.0
        %710 = vmatpush2.msra.mxu0 0.0
        %711 = vmatprep.subr.mxu0 0.0
        %712 = vmatpush2.msra.mxu0 0.0
        %713 = vmatprep.subr.mxu0 0.0
        %714 = vmatpush2.msra.mxu0 0.0
        %715 = vmatprep.subr.mxu0 0.0
        %716 = vmatpush2.msra.mxu0 0.0
        %717 = vmatprep.subr.mxu0 0.0
        %718 = vmatpush2.msra.mxu0 0.0
        %719 = vmatprep.subr.mxu0 0.0
        %720 = vmatpush2.msra.mxu0 0.0
        %721 = vmatprep.subr.mxu0 0.0
        %722 = vmatpush2.msra.mxu0 0.0
        %723 = vmatprep.subr.mxu0 0.0
        %724 = vmatpush2.msra.mxu0 0.0
        %725 = vmatprep.subr.mxu0 0.0
        %726 = vmatpush2.msra.mxu0 0.0
        %727 = vmatprep.mubr.f32.mxu0 0.0
        %728 = vmatmul.mubr.f32.gmra.mxu0 0.0078125
        %v729 = vpop.f32.mrf.mxu0
        %v730 = vadd.f32 1e-05, %v729
        %v731 = vpop.f32.mrf.mxu0
        %732 = vdwg.mxu0
        %v733 = vrsqrt.pop %v730
        %v734 = vlaneseq
        %v735 = vshrl.u32 %v734, 7
        %v736 = vsub.s32 0, %v735
        %v737 = vrot.slane %v733, %v736
        %v738 = vmul.f32 %v631, %v737
        %v739 = vmul.f32 %v632, %v737
        %v740 = vmul.f32 %v633, %v737
        %v741 = vmul.f32 %v634, %v737
        %v742 = vmul.f32 %v635, %v737
        %v743 = vmul.f32 %v636, %v737
        %v744 = vmul.f32 %v637, %v737
        %v745 = vmul.f32 %v638, %v737
        %v746 = vmul.f32 %v639, %v737
        %v747 = vmul.f32 %v640, %v737
        %v748 = vmul.f32 %v641, %v737
        %v749 = vmul.f32 %v642, %v737
        %v750 = vmul.f32 %v643, %v737
        %v751 = vmul.f32 %v644, %v737
        %v752 = vmul.f32 %v645, %v737
        %v753 = vmul.f32 %v646, %v737
        %v754 = vlaneseq
        %v755 = vshrl.u32 %v754, 7
        %v756 = vsub.s32 0, %v755
        %v757 = vrot.slane %v233, %v756
        %v758 = vmul.f32 %v738, %v757
        %v759 = vmul.f32 %v739, %v757
        %v760 = vmul.f32 %v740, %v757
        %v761 = vmul.f32 %v741, %v757
        %v762 = vmul.f32 %v742, %v757
        %v763 = vmul.f32 %v743, %v757
        %v764 = vmul.f32 %v744, %v757
        %v765 = vmul.f32 %v745, %v757
        %v766 = vmul.f32 %v746, %v757
        %v767 = vmul.f32 %v747, %v757
        %v768 = vmul.f32 %v748, %v757
        %v769 = vmul.f32 %v749, %v757
        %v770 = vmul.f32 %v750, %v757
        %v771 = vmul.f32 %v751, %v757
        %v772 = vmul.f32 %v752, %v757
        %v773 = vmul.f32 %v753, %v757
        %v774 = vlaneseq
        %v775 = vshrl.u32 %v774, 7
        %v776 = vsub.s32 1, %v775
        %v777 = vrot.slane %v233, %v776
        %v778 = vadd.f32 %v758, %v777
        %v779 = vadd.f32 %v759, %v777
        %v780 = vadd.f32 %v760, %v777
        %v781 = vadd.f32 %v761, %v777
        %v782 = vadd.f32 %v762, %v777
        %v783 = vadd.f32 %v763, %v777
        %v784 = vadd.f32 %v764, %v777
        %v785 = vadd.f32 %v765, %v777
        %v786 = vadd.f32 %v766, %v777
        %v787 = vadd.f32 %v767, %v777
        %v788 = vadd.f32 %v768, %v777
        %v789 = vadd.f32 %v769, %v777
        %v790 = vadd.f32 %v770, %v777
        %v791 = vadd.f32 %v771, %v777
        %v792 = vadd.f32 %v772, %v777
        %v793 = vadd.f32 %v773, %v777
        %v794 = vmax.f32 %v778, 0.0
        %v795 = vmax.f32 %v779, 0.0
        %v796 = vmax.f32 %v780, 0.0
        %v797 = vmax.f32 %v781, 0.0
        %v798 = vmax.f32 %v782, 0.0
        %v799 = vmax.f32 %v783, 0.0
        %v800 = vmax.f32 %v784, 0.0
        %v801 = vmax.f32 %v785, 0.0
        %v802 = vmax.f32 %v786, 0.0
        %v803 = vmax.f32 %v787, 0.0
        %v804 = vmax.f32 %v788, 0.0
        %v805 = vmax.f32 %v789, 0.0
        %v806 = vmax.f32 %v790, 0.0
        %v807 = vmax.f32 %v791, 0.0
        %v808 = vmax.f32 %v792, 0.0
        %v809 = vmax.f32 %v793, 0.0
        %v810 = vld [vmem:[%s2 + $0x88] sm:$0xff]
        %v811 = vld [vmem:[%s2 + $0x90] sm:$0xff]
        %v812 = vld [vmem:[%s2 + $0x98] sm:$0xff]
        %v813 = vld [vmem:[%s2 + $0xa0] sm:$0xff]
        %vm814 = vcmask 261120
        %v816 = vsel %vm814, %v794, 0
        %v819 = vsel %vm814, %v795, 0
        %v822 = vsel %vm814, %v796, 0
        %v825 = vsel %vm814, %v797, 0
        %v828 = vsel %vm814, %v798, 0
        %v831 = vsel %vm814, %v799, 0
        %v834 = vsel %vm814, %v800, 0
        %v837 = vsel %vm814, %v801, 0
        %v840 = vsel %vm814, %v802, 0
        %v843 = vsel %vm814, %v803, 0
        %v846 = vsel %vm814, %v804, 0
        %v849 = vsel %vm814, %v805, 0
        %v852 = vsel %vm814, %v806, 0
        %v855 = vsel %vm814, %v807, 0
        %v858 = vsel %vm814, %v808, 0
        %v861 = vsel %vm814, %v809, 0
        %863 = vmatprep.subr.mxu0 0.0
        %864 = vmatpush1.msra.mxu0 0.0
        %865 = vmatprep.subr.mxu0 0.0
        %866 = vmatpush1.msra.mxu0 0.0
        %867 = vmatprep.subr.mxu0 0.0
        %868 = vmatpush1.msra.mxu0 0.0
        %869 = vmatprep.subr.mxu0 0.0
        %870 = vmatpush1.msra.mxu0 0.0
        %871 = vmatprep.subr.mxu0 0.0
        %872 = vmatpush1.msra.mxu0 0.0
        %873 = vmatprep.subr.mxu0 0.0
        %874 = vmatpush1.msra.mxu0 0.0
        %875 = vmatprep.subr.mxu0 0.0
        %876 = vmatpush1.msra.mxu0 0.0
        %877 = vmatprep.subr.mxu0 0.0
        %878 = vmatpush1.msra.mxu0 0.0
        %879 = vmatprep.subr.mxu0 0.0
        %880 = vmatpush1.msra.mxu0 0.0
        %881 = vmatprep.subr.mxu0 0.0
        %882 = vmatpush1.msra.mxu0 0.0
        %883 = vmatprep.subr.mxu0 0.0
        %884 = vmatpush1.msra.mxu0 0.0
        %885 = vmatprep.subr.mxu0 0.0
        %886 = vmatpush1.msra.mxu0 0.0
        %887 = vmatprep.subr.mxu0 0.0
        %888 = vmatpush1.msra.mxu0 %v813
        %889 = vmatprep.subr.mxu0 0.0
        %890 = vmatpush1.msra.mxu0 %v812
        %891 = vmatprep.subr.mxu0 0.0
        %892 = vmatpush1.msra.mxu0 %v811
        %893 = vmatprep.subr.mxu0 0.0
        %894 = vmatpush1.msra.mxu0 %v810
        %895 = vmatprep.subr.mxu0 0.0
        %896 = vmatpush2.msra.mxu0 0.0
        %897 = vmatprep.subr.mxu0 0.0
        %898 = vmatpush2.msra.mxu0 0.0
        %899 = vmatprep.subr.mxu0 0.0
        %900 = vmatpush2.msra.mxu0 0.0
        %901 = vmatprep.subr.mxu0 0.0
        %902 = vmatpush2.msra.mxu0 0.0
        %903 = vmatprep.subr.mxu0 0.0
        %904 = vmatpush2.msra.mxu0 0.0
        %905 = vmatprep.subr.mxu0 0.0
        %906 = vmatpush2.msra.mxu0 0.0
        %907 = vmatprep.subr.mxu0 0.0
        %908 = vmatpush2.msra.mxu0 0.0
        %909 = vmatprep.subr.mxu0 0.0
        %910 = vmatpush2.msra.mxu0 0.0
        %911 = vmatprep.subr.mxu0 0.0
        %912 = vmatpush2.msra.mxu0 0.0
        %913 = vmatprep.subr.mxu0 0.0
        %914 = vmatpush2.msra.mxu0 0.0
        %915 = vmatprep.subr.mxu0 0.0
        %916 = vmatpush2.msra.mxu0 0.0
        %917 = vmatprep.subr.mxu0 0.0
        %918 = vmatpush2.msra.mxu0 0.0
        %919 = vmatprep.subr.mxu0 0.0
        %920 = vmatpush2.msra.mxu0 0.0
        %921 = vmatprep.subr.mxu0 0.0
        %922 = vmatpush2.msra.mxu0 0.0
        %923 = vmatprep.subr.mxu0 0.0
        %924 = vmatpush2.msra.mxu0 0.0
        %925 = vmatprep.subr.mxu0 0.0
        %926 = vmatpush2.msra.mxu0 0.0
        %927 = vmatprep.mubr.f32.mxu0 0.0
        %928 = vmatmul.mubr.f32.gmra.mxu0 %v816
        %v929 = vpop.f32.mrf.mxu0
        %v930 = vadd.f32 0.0, %v929
        %v931 = vpop.f32.mrf.mxu0
        %932 = vmatprep.mubr.f32.mxu0 0.0
        %933 = vmatmul.mubr.f32.gmra.mxu0 %v819
        %v934 = vpop.f32.mrf.mxu0
        %v935 = vadd.f32 0.0, %v934
        %v936 = vpop.f32.mrf.mxu0
        %937 = vmatprep.mubr.f32.mxu0 0.0
        %938 = vmatmul.mubr.f32.gmra.mxu0 %v822
        %v939 = vpop.f32.mrf.mxu0
        %v940 = vadd.f32 0.0, %v939
        %v941 = vpop.f32.mrf.mxu0
        %942 = vmatprep.mubr.f32.mxu0 0.0
        %943 = vmatmul.mubr.f32.gmra.mxu0 %v825
        %v944 = vpop.f32.mrf.mxu0
        %v945 = vadd.f32 0.0, %v944
        %v946 = vpop.f32.mrf.mxu0
        %947 = vmatprep.mubr.f32.mxu0 0.0
        %948 = vmatmul.mubr.f32.gmra.mxu0 %v828
        %v949 = vpop.f32.mrf.mxu0
        %v950 = vadd.f32 0.0, %v949
        %v951 = vpop.f32.mrf.mxu0
        %952 = vmatprep.mubr.f32.mxu0 0.0
        %953 = vmatmul.mubr.f32.gmra.mxu0 %v831
        %v954 = vpop.f32.mrf.mxu0
        %v955 = vadd.f32 0.0, %v954
        %v956 = vpop.f32.mrf.mxu0
        %957 = vmatprep.mubr.f32.mxu0 0.0
        %958 = vmatmul.mubr.f32.gmra.mxu0 %v834
        %v959 = vpop.f32.mrf.mxu0
        %v960 = vadd.f32 0.0, %v959
        %v961 = vpop.f32.mrf.mxu0
        %962 = vmatprep.mubr.f32.mxu0 0.0
        %963 = vmatmul.mubr.f32.gmra.mxu0 %v837
        %v964 = vpop.f32.mrf.mxu0
        %v965 = vadd.f32 0.0, %v964
        %v966 = vpop.f32.mrf.mxu0
        %967 = vmatprep.mubr.f32.mxu0 0.0
        %968 = vmatmul.mubr.f32.gmra.mxu0 %v840
        %v969 = vpop.f32.mrf.mxu0
        %v970 = vadd.f32 0.0, %v969
        %v971 = vpop.f32.mrf.mxu0
        %972 = vmatprep.mubr.f32.mxu0 0.0
        %973 = vmatmul.mubr.f32.gmra.mxu0 %v843
        %v974 = vpop.f32.mrf.mxu0
        %v975 = vadd.f32 0.0, %v974
        %v976 = vpop.f32.mrf.mxu0
        %977 = vmatprep.mubr.f32.mxu0 0.0
        %978 = vmatmul.mubr.f32.gmra.mxu0 %v846
        %v979 = vpop.f32.mrf.mxu0
        %v980 = vadd.f32 0.0, %v979
        %v981 = vpop.f32.mrf.mxu0
        %982 = vmatprep.mubr.f32.mxu0 0.0
        %983 = vmatmul.mubr.f32.gmra.mxu0 %v849
        %v984 = vpop.f32.mrf.mxu0
        %v985 = vadd.f32 0.0, %v984
        %v986 = vpop.f32.mrf.mxu0
        %987 = vmatprep.mubr.f32.mxu0 0.0
        %988 = vmatmul.mubr.f32.gmra.mxu0 %v852
        %v989 = vpop.f32.mrf.mxu0
        %v990 = vadd.f32 0.0, %v989
        %v991 = vpop.f32.mrf.mxu0
        %992 = vmatprep.mubr.f32.mxu0 0.0
        %993 = vmatmul.mubr.f32.gmra.mxu0 %v855
        %v994 = vpop.f32.mrf.mxu0
        %v995 = vadd.f32 0.0, %v994
        %v996 = vpop.f32.mrf.mxu0
        %997 = vmatprep.mubr.f32.mxu0 0.0
        %998 = vmatmul.mubr.f32.gmra.mxu0 %v858
        %v999 = vpop.f32.mrf.mxu0
        %v1000 = vadd.f32 0.0, %v999
        %v1001 = vpop.f32.mrf.mxu0
        %1002 = vmatprep.mubr.f32.mxu0 0.0
        %1003 = vmatmul.mubr.f32.gmra.mxu0 %v861
        %v1004 = vpop.f32.mrf.mxu0
        %v1005 = vadd.f32 0.0, %v1004
        %v1006 = vpop.f32.mrf.mxu0
        %1007 = vdwg.mxu0
        %1008 = vmatprep.subr.mxu0 0.0
        %1009 = vmatpush1.msra.mxu0 %v1005
        %1010 = vmatprep.subr.mxu0 0.0
        %1011 = vmatpush1.msra.mxu0 %v1000
        %1012 = vmatprep.subr.mxu0 0.0
        %1013 = vmatpush1.msra.mxu0 %v995
        %1014 = vmatprep.subr.mxu0 0.0
        %1015 = vmatpush1.msra.mxu0 %v990
        %1016 = vmatprep.subr.mxu0 0.0
        %1017 = vmatpush1.msra.mxu0 %v985
        %1018 = vmatprep.subr.mxu0 0.0
        %1019 = vmatpush1.msra.mxu0 %v980
        %1020 = vmatprep.subr.mxu0 0.0
        %1021 = vmatpush1.msra.mxu0 %v975
        %1022 = vmatprep.subr.mxu0 0.0
        %1023 = vmatpush1.msra.mxu0 %v970
        %1024 = vmatprep.subr.mxu0 0.0
        %1025 = vmatpush1.msra.mxu0 %v965
        %1026 = vmatprep.subr.mxu0 0.0
        %1027 = vmatpush1.msra.mxu0 %v960
        %1028 = vmatprep.subr.mxu0 0.0
        %1029 = vmatpush1.msra.mxu0 %v955
        %1030 = vmatprep.subr.mxu0 0.0
        %1031 = vmatpush1.msra.mxu0 %v950
        %1032 = vmatprep.subr.mxu0 0.0
        %1033 = vmatpush1.msra.mxu0 %v945
        %1034 = vmatprep.subr.mxu0 0.0
        %1035 = vmatpush1.msra.mxu0 %v940
        %1036 = vmatprep.subr.mxu0 0.0
        %1037 = vmatpush1.msra.mxu0 %v935
        %1038 = vmatprep.subr.mxu0 0.0
        %1039 = vmatpush1.msra.mxu0 %v930
        %1040 = vmatprep.subr.mxu0 0.0
        %1041 = vmatpush2.msra.mxu0 0.0
        %1042 = vmatprep.subr.mxu0 0.0
        %1043 = vmatpush2.msra.mxu0 0.0
        %1044 = vmatprep.subr.mxu0 0.0
        %1045 = vmatpush2.msra.mxu0 0.0
        %1046 = vmatprep.subr.mxu0 0.0
        %1047 = vmatpush2.msra.mxu0 0.0
        %1048 = vmatprep.subr.mxu0 0.0
        %1049 = vmatpush2.msra.mxu0 0.0
        %1050 = vmatprep.subr.mxu0 0.0
        %1051 = vmatpush2.msra.mxu0 0.0
        %1052 = vmatprep.subr.mxu0 0.0
        %1053 = vmatpush2.msra.mxu0 0.0
        %1054 = vmatprep.subr.mxu0 0.0
        %1055 = vmatpush2.msra.mxu0 0.0
        %1056 = vmatprep.subr.mxu0 0.0
        %1057 = vmatpush2.msra.mxu0 0.0
        %1058 = vmatprep.subr.mxu0 0.0
        %1059 = vmatpush2.msra.mxu0 0.0
        %1060 = vmatprep.subr.mxu0 0.0
        %1061 = vmatpush2.msra.mxu0 0.0
        %1062 = vmatprep.subr.mxu0 0.0
        %1063 = vmatpush2.msra.mxu0 0.0
        %1064 = vmatprep.subr.mxu0 0.0
        %1065 = vmatpush2.msra.mxu0 0.0
        %1066 = vmatprep.subr.mxu0 0.0
        %1067 = vmatpush2.msra.mxu0 0.0
        %1068 = vmatprep.subr.mxu0 0.0
        %1069 = vmatpush2.msra.mxu0 0.0
        %1070 = vmatprep.subr.mxu0 0.0
        %1071 = vmatpush2.msra.mxu0 0.0
        %1072 = vmatprep.mubr.f32.mxu0 0.0
        %1073 = vmatmul.mubr.f32.gmra.mxu0 %v216
        %v1074 = vpop.f32.mrf.mxu0
        %v1075 = vadd.f32 0.0, %v1074
        %v1076 = vpop.f32.mrf.mxu0
        %1077 = vmatprep.mubr.f32.mxu0 0.0
        %1078 = vmatmul.mubr.f32.gmra.mxu0 %v217
        %v1079 = vpop.f32.mrf.mxu0
        %v1080 = vadd.f32 0.0, %v1079
        %v1081 = vpop.f32.mrf.mxu0
        %1082 = vmatprep.mubr.f32.mxu0 0.0
        %1083 = vmatmul.mubr.f32.gmra.mxu0 %v218
        %v1084 = vpop.f32.mrf.mxu0
        %v1085 = vadd.f32 0.0, %v1084
        %v1086 = vpop.f32.mrf.mxu0
        %1087 = vmatprep.mubr.f32.mxu0 0.0
        %1088 = vmatmul.mubr.f32.gmra.mxu0 %v219
        %v1089 = vpop.f32.mrf.mxu0
        %v1090 = vadd.f32 0.0, %v1089
        %v1091 = vpop.f32.mrf.mxu0
        %1092 = vmatprep.mubr.f32.mxu0 0.0
        %1093 = vmatmul.mubr.f32.gmra.mxu0 %v220
        %v1094 = vpop.f32.mrf.mxu0
        %v1095 = vadd.f32 0.0, %v1094
        %v1096 = vpop.f32.mrf.mxu0
        %1097 = vmatprep.mubr.f32.mxu0 0.0
        %1098 = vmatmul.mubr.f32.gmra.mxu0 %v221
        %v1099 = vpop.f32.mrf.mxu0
        %v1100 = vadd.f32 0.0, %v1099
        %v1101 = vpop.f32.mrf.mxu0
        %1102 = vmatprep.mubr.f32.mxu0 0.0
        %1103 = vmatmul.mubr.f32.gmra.mxu0 %v222
        %v1104 = vpop.f32.mrf.mxu0
        %v1105 = vadd.f32 0.0, %v1104
        %v1106 = vpop.f32.mrf.mxu0
        %1107 = vmatprep.mubr.f32.mxu0 0.0
        %1108 = vmatmul.mubr.f32.gmra.mxu0 %v223
        %v1109 = vpop.f32.mrf.mxu0
        %v1110 = vadd.f32 0.0, %v1109
        %v1111 = vpop.f32.mrf.mxu0
        %1112 = vmatprep.mubr.f32.mxu0 0.0
        %1113 = vmatmul.mubr.f32.gmra.mxu0 %v224
        %v1114 = vpop.f32.mrf.mxu0
        %v1115 = vadd.f32 0.0, %v1114
        %v1116 = vpop.f32.mrf.mxu0
        %1117 = vmatprep.mubr.f32.mxu0 0.0
        %1118 = vmatmul.mubr.f32.gmra.mxu0 %v225
        %v1119 = vpop.f32.mrf.mxu0
        %v1120 = vadd.f32 0.0, %v1119
        %v1121 = vpop.f32.mrf.mxu0
        %1122 = vmatprep.mubr.f32.mxu0 0.0
        %1123 = vmatmul.mubr.f32.gmra.mxu0 %v226
        %v1124 = vpop.f32.mrf.mxu0
        %v1125 = vadd.f32 0.0, %v1124
        %v1126 = vpop.f32.mrf.mxu0
        %1127 = vmatprep.mubr.f32.mxu0 0.0
        %1128 = vmatmul.mubr.f32.gmra.mxu0 %v227
        %v1129 = vpop.f32.mrf.mxu0
        %v1130 = vadd.f32 0.0, %v1129
        %v1131 = vpop.f32.mrf.mxu0
        %1132 = vmatprep.mubr.f32.mxu0 0.0
        %1133 = vmatmul.mubr.f32.gmra.mxu0 %v228
        %v1134 = vpop.f32.mrf.mxu0
        %v1135 = vadd.f32 0.0, %v1134
        %v1136 = vpop.f32.mrf.mxu0
        %1137 = vmatprep.mubr.f32.mxu0 0.0
        %1138 = vmatmul.mubr.f32.gmra.mxu0 %v229
        %v1139 = vpop.f32.mrf.mxu0
        %v1140 = vadd.f32 0.0, %v1139
        %v1141 = vpop.f32.mrf.mxu0
        %1142 = vmatprep.mubr.f32.mxu0 0.0
        %1143 = vmatmul.mubr.f32.gmra.mxu0 %v230
        %v1144 = vpop.f32.mrf.mxu0
        %v1145 = vadd.f32 0.0, %v1144
        %v1146 = vpop.f32.mrf.mxu0
        %1147 = vmatprep.mubr.f32.mxu0 0.0
        %1148 = vmatmul.mubr.f32.gmra.mxu0 %v231
        %v1149 = vpop.f32.mrf.mxu0
        %v1150 = vadd.f32 0.0, %v1149
        %v1151 = vpop.f32.mrf.mxu0
        %1152 = vmatprep.mubr.f32.mxu0 0.0
        %1153 = vmatmul.mubr.f32.gmra.mxu0 %v232
        %v1154 = vpop.f32.mrf.mxu0
        %v1155 = vadd.f32 0.0, %v1154
        %v1156 = vpop.f32.mrf.mxu0
        %1157 = vdwg.mxu0
        %v1158 = vlaneseq
        %v1159 = vshrl.u32 %v1158, 7
        %v1160 = vsub.s32 0, %v1159
        %v1161 = vrot.slane %v1155, %v1160
        %v1162 = vsub.f32 %v1075, %v1161
        %v1163 = vsub.f32 %v1080, %v1161
        %v1164 = vsub.f32 %v1085, %v1161
        %v1165 = vsub.f32 %v1090, %v1161
        %v1166 = vsub.f32 %v1095, %v1161
        %v1167 = vsub.f32 %v1100, %v1161
        %v1168 = vsub.f32 %v1105, %v1161
        %v1169 = vsub.f32 %v1110, %v1161
        %v1170 = vsub.f32 %v1115, %v1161
        %v1171 = vsub.f32 %v1120, %v1161
        %v1172 = vsub.f32 %v1125, %v1161
        %v1173 = vsub.f32 %v1130, %v1161
        %v1174 = vsub.f32 %v1135, %v1161
        %v1175 = vsub.f32 %v1140, %v1161
        %v1176 = vsub.f32 %v1145, %v1161
        %v1177 = vsub.f32 %v1150, %v1161
        %v1178 = vmul.f32 %v1162, %v1162
        %v1179 = vmul.f32 %v1163, %v1163
        %v1180 = vmul.f32 %v1164, %v1164
        %v1181 = vmul.f32 %v1165, %v1165
        %v1182 = vmul.f32 %v1166, %v1166
        %v1183 = vmul.f32 %v1167, %v1167
        %v1184 = vmul.f32 %v1168, %v1168
        %v1185 = vmul.f32 %v1169, %v1169
        %v1186 = vmul.f32 %v1170, %v1170
        %v1187 = vmul.f32 %v1171, %v1171
        %v1188 = vmul.f32 %v1172, %v1172
        %v1189 = vmul.f32 %v1173, %v1173
        %v1190 = vmul.f32 %v1174, %v1174
        %v1191 = vmul.f32 %v1175, %v1175
        %v1192 = vmul.f32 %v1176, %v1176
        %v1193 = vmul.f32 %v1177, %v1177
        %1194 = vmatprep.subr.mxu0 0.0
        %1195 = vmatpush1.msra.mxu0 %v1193
        %1196 = vmatprep.subr.mxu0 0.0
        %1197 = vmatpush1.msra.mxu0 %v1192
        %1198 = vmatprep.subr.mxu0 0.0
        %1199 = vmatpush1.msra.mxu0 %v1191
        %1200 = vmatprep.subr.mxu0 0.0
        %1201 = vmatpush1.msra.mxu0 %v1190
        %1202 = vmatprep.subr.mxu0 0.0
        %1203 = vmatpush1.msra.mxu0 %v1189
        %1204 = vmatprep.subr.mxu0 0.0
        %1205 = vmatpush1.msra.mxu0 %v1188
        %1206 = vmatprep.subr.mxu0 0.0
        %1207 = vmatpush1.msra.mxu0 %v1187
        %1208 = vmatprep.subr.mxu0 0.0
        %1209 = vmatpush1.msra.mxu0 %v1186
        %1210 = vmatprep.subr.mxu0 0.0
        %1211 = vmatpush1.msra.mxu0 %v1185
        %1212 = vmatprep.subr.mxu0 0.0
        %1213 = vmatpush1.msra.mxu0 %v1184
        %1214 = vmatprep.subr.mxu0 0.0
        %1215 = vmatpush1.msra.mxu0 %v1183
        %1216 = vmatprep.subr.mxu0 0.0
        %1217 = vmatpush1.msra.mxu0 %v1182
        %1218 = vmatprep.subr.mxu0 0.0
        %1219 = vmatpush1.msra.mxu0 %v1181
        %1220 = vmatprep.subr.mxu0 0.0
        %1221 = vmatpush1.msra.mxu0 %v1180
        %1222 = vmatprep.subr.mxu0 0.0
        %1223 = vmatpush1.msra.mxu0 %v1179
        %1224 = vmatprep.subr.mxu0 0.0
        %1225 = vmatpush1.msra.mxu0 %v1178
        %1226 = vmatprep.subr.mxu0 0.0
        %1227 = vmatpush2.msra.mxu0 0.0
        %1228 = vmatprep.subr.mxu0 0.0
        %1229 = vmatpush2.msra.mxu0 0.0
        %1230 = vmatprep.subr.mxu0 0.0
        %1231 = vmatpush2.msra.mxu0 0.0
        %1232 = vmatprep.subr.mxu0 0.0
        %1233 = vmatpush2.msra.mxu0 0.0
        %1234 = vmatprep.subr.mxu0 0.0
        %1235 = vmatpush2.msra.mxu0 0.0
        %1236 = vmatprep.subr.mxu0 0.0
        %1237 = vmatpush2.msra.mxu0 0.0
        %1238 = vmatprep.subr.mxu0 0.0
        %1239 = vmatpush2.msra.mxu0 0.0
        %1240 = vmatprep.subr.mxu0 0.0
        %1241 = vmatpush2.msra.mxu0 0.0
        %1242 = vmatprep.subr.mxu0 0.0
        %1243 = vmatpush2.msra.mxu0 0.0
        %1244 = vmatprep.subr.mxu0 0.0
        %1245 = vmatpush2.msra.mxu0 0.0
        %1246 = vmatprep.subr.mxu0 0.0
        %1247 = vmatpush2.msra.mxu0 0.0
        %1248 = vmatprep.subr.mxu0 0.0
        %1249 = vmatpush2.msra.mxu0 0.0
        %1250 = vmatprep.subr.mxu0 0.0
        %1251 = vmatpush2.msra.mxu0 0.0
        %1252 = vmatprep.subr.mxu0 0.0
        %1253 = vmatpush2.msra.mxu0 0.0
        %1254 = vmatprep.subr.mxu0 0.0
        %1255 = vmatpush2.msra.mxu0 0.0
        %1256 = vmatprep.subr.mxu0 0.0
        %1257 = vmatpush2.msra.mxu0 0.0
        %1258 = vmatprep.mubr.f32.mxu0 0.0
        %1259 = vmatmul.mubr.f32.gmra.mxu0 0.0078125
        %v1260 = vpop.f32.mrf.mxu0
        %v1261 = vadd.f32 1e-05, %v1260
        %v1262 = vpop.f32.mrf.mxu0
        %1263 = vdwg.mxu0
        %v1264 = vrsqrt.pop %v1261
        %v1265 = vlaneseq
        %v1266 = vshrl.u32 %v1265, 7
        %v1267 = vsub.s32 0, %v1266
        %v1268 = vrot.slane %v1264, %v1267
        %v1269 = vmul.f32 %v1162, %v1268
        %v1270 = vmul.f32 %v1163, %v1268
        %v1271 = vmul.f32 %v1164, %v1268
        %v1272 = vmul.f32 %v1165, %v1268
        %v1273 = vmul.f32 %v1166, %v1268
        %v1274 = vmul.f32 %v1167, %v1268
        %v1275 = vmul.f32 %v1168, %v1268
        %v1276 = vmul.f32 %v1169, %v1268
        %v1277 = vmul.f32 %v1170, %v1268
        %v1278 = vmul.f32 %v1171, %v1268
        %v1279 = vmul.f32 %v1172, %v1268
        %v1280 = vmul.f32 %v1173, %v1268
        %v1281 = vmul.f32 %v1174, %v1268
        %v1282 = vmul.f32 %v1175, %v1268
        %v1283 = vmul.f32 %v1176, %v1268
        %v1284 = vmul.f32 %v1177, %v1268
        %v1285 = vlaneseq
        %v1286 = vshrl.u32 %v1285, 7
        %v1287 = vsub.s32 2, %v1286
        %v1288 = vrot.slane %v233, %v1287
        %v1289 = vmul.f32 %v1269, %v1288
        %v1290 = vmul.f32 %v1270, %v1288
        %v1291 = vmul.f32 %v1271, %v1288
        %v1292 = vmul.f32 %v1272, %v1288
        %v1293 = vmul.f32 %v1273, %v1288
        %v1294 = vmul.f32 %v1274, %v1288
        %v1295 = vmul.f32 %v1275, %v1288
        %v1296 = vmul.f32 %v1276, %v1288
        %v1297 = vmul.f32 %v1277, %v1288
        %v1298 = vmul.f32 %v1278, %v1288
        %v1299 = vmul.f32 %v1279, %v1288
        %v1300 = vmul.f32 %v1280, %v1288
        %v1301 = vmul.f32 %v1281, %v1288
        %v1302 = vmul.f32 %v1282, %v1288
        %v1303 = vmul.f32 %v1283, %v1288
        %v1304 = vmul.f32 %v1284, %v1288
        %v1305 = vlaneseq
        %v1306 = vshrl.u32 %v1305, 7
        %v1307 = vsub.s32 3, %v1306
        %v1308 = vrot.slane %v233, %v1307
        %v1309 = vadd.f32 %v1289, %v1308
        %v1310 = vadd.f32 %v1290, %v1308
        %v1311 = vadd.f32 %v1291, %v1308
        %v1312 = vadd.f32 %v1292, %v1308
        %v1313 = vadd.f32 %v1293, %v1308
        %v1314 = vadd.f32 %v1294, %v1308
        %v1315 = vadd.f32 %v1295, %v1308
        %v1316 = vadd.f32 %v1296, %v1308
        %v1317 = vadd.f32 %v1297, %v1308
        %v1318 = vadd.f32 %v1298, %v1308
        %v1319 = vadd.f32 %v1299, %v1308
        %v1320 = vadd.f32 %v1300, %v1308
        %v1321 = vadd.f32 %v1301, %v1308
        %v1322 = vadd.f32 %v1302, %v1308
        %v1323 = vadd.f32 %v1303, %v1308
        %v1324 = vadd.f32 %v1304, %v1308
        %v1325 = vmax.f32 %v1309, 0.0
        %v1326 = vmax.f32 %v1310, 0.0
        %v1327 = vmax.f32 %v1311, 0.0
        %v1328 = vmax.f32 %v1312, 0.0
        %v1329 = vmax.f32 %v1313, 0.0
        %v1330 = vmax.f32 %v1314, 0.0
        %v1331 = vmax.f32 %v1315, 0.0
        %v1332 = vmax.f32 %v1316, 0.0
        %v1333 = vmax.f32 %v1317, 0.0
        %v1334 = vmax.f32 %v1318, 0.0
        %v1335 = vmax.f32 %v1319, 0.0
        %v1336 = vmax.f32 %v1320, 0.0
        %v1337 = vmax.f32 %v1321, 0.0
        %v1338 = vmax.f32 %v1322, 0.0
        %v1339 = vmax.f32 %v1323, 0.0
        %v1340 = vmax.f32 %v1324, 0.0
        %v1341 = vld [vmem:[%s2 + $0xa8] sm:$0xff]
        %v1342 = vld [vmem:[%s2 + $0xb0] sm:$0xff]
        %v1343 = vld [vmem:[%s2 + $0xb8] sm:$0xff]
        %v1344 = vld [vmem:[%s2 + $0xc0] sm:$0xff]
        %v1346 = vsel %vm814, %v1325, 0
        %v1349 = vsel %vm814, %v1326, 0
        %v1352 = vsel %vm814, %v1327, 0
        %v1355 = vsel %vm814, %v1328, 0
        %v1358 = vsel %vm814, %v1329, 0
        %v1361 = vsel %vm814, %v1330, 0
        %v1364 = vsel %vm814, %v1331, 0
        %v1367 = vsel %vm814, %v1332, 0
        %v1370 = vsel %vm814, %v1333, 0
        %v1373 = vsel %vm814, %v1334, 0
        %v1376 = vsel %vm814, %v1335, 0
        %v1379 = vsel %vm814, %v1336, 0
        %v1382 = vsel %vm814, %v1337, 0
        %v1385 = vsel %vm814, %v1338, 0
        %v1388 = vsel %vm814, %v1339, 0
        %v1391 = vsel %vm814, %v1340, 0
        %1393 = vmatprep.subr.mxu0 0.0
        %1394 = vmatpush1.msra.mxu0 0.0
        %1395 = vmatprep.subr.mxu0 0.0
        %1396 = vmatpush1.msra.mxu0 0.0
        %1397 = vmatprep.subr.mxu0 0.0
        %1398 = vmatpush1.msra.mxu0 0.0
        %1399 = vmatprep.subr.mxu0 0.0
        %1400 = vmatpush1.msra.mxu0 0.0
        %1401 = vmatprep.subr.mxu0 0.0
        %1402 = vmatpush1.msra.mxu0 0.0
        %1403 = vmatprep.subr.mxu0 0.0
        %1404 = vmatpush1.msra.mxu0 0.0
        %1405 = vmatprep.subr.mxu0 0.0
        %1406 = vmatpush1.msra.mxu0 0.0
        %1407 = vmatprep.subr.mxu0 0.0
        %1408 = vmatpush1.msra.mxu0 0.0
        %1409 = vmatprep.subr.mxu0 0.0
        %1410 = vmatpush1.msra.mxu0 0.0
        %1411 = vmatprep.subr.mxu0 0.0
        %1412 = vmatpush1.msra.mxu0 0.0
        %1413 = vmatprep.subr.mxu0 0.0
        %1414 = vmatpush1.msra.mxu0 0.0
        %1415 = vmatprep.subr.mxu0 0.0
        %1416 = vmatpush1.msra.mxu0 0.0
        %1417 = vmatprep.subr.mxu0 0.0
        %1418 = vmatpush1.msra.mxu0 %v1344
        %1419 = vmatprep.subr.mxu0 0.0
        %1420 = vmatpush1.msra.mxu0 %v1343
        %1421 = vmatprep.subr.mxu0 0.0
        %1422 = vmatpush1.msra.mxu0 %v1342
        %1423 = vmatprep.subr.mxu0 0.0
        %1424 = vmatpush1.msra.mxu0 %v1341
        %1425 = vmatprep.subr.mxu0 0.0
        %1426 = vmatpush2.msra.mxu0 0.0
        %1427 = vmatprep.subr.mxu0 0.0
        %1428 = vmatpush2.msra.mxu0 0.0
        %1429 = vmatprep.subr.mxu0 0.0
        %1430 = vmatpush2.msra.mxu0 0.0
        %1431 = vmatprep.subr.mxu0 0.0
        %1432 = vmatpush2.msra.mxu0 0.0
        %1433 = vmatprep.subr.mxu0 0.0
        %1434 = vmatpush2.msra.mxu0 0.0
        %1435 = vmatprep.subr.mxu0 0.0
        %1436 = vmatpush2.msra.mxu0 0.0
        %1437 = vmatprep.subr.mxu0 0.0
        %1438 = vmatpush2.msra.mxu0 0.0
        %1439 = vmatprep.subr.mxu0 0.0
        %1440 = vmatpush2.msra.mxu0 0.0
        %1441 = vmatprep.subr.mxu0 0.0
        %1442 = vmatpush2.msra.mxu0 0.0
        %1443 = vmatprep.subr.mxu0 0.0
        %1444 = vmatpush2.msra.mxu0 0.0
        %1445 = vmatprep.subr.mxu0 0.0
        %1446 = vmatpush2.msra.mxu0 0.0
        %1447 = vmatprep.subr.mxu0 0.0
        %1448 = vmatpush2.msra.mxu0 0.0
        %1449 = vmatprep.subr.mxu0 0.0
        %1450 = vmatpush2.msra.mxu0 0.0
        %1451 = vmatprep.subr.mxu0 0.0
        %1452 = vmatpush2.msra.mxu0 0.0
        %1453 = vmatprep.subr.mxu0 0.0
        %1454 = vmatpush2.msra.mxu0 0.0
        %1455 = vmatprep.subr.mxu0 0.0
        %1456 = vmatpush2.msra.mxu0 0.0
        %1457 = vmatprep.mubr.f32.mxu0 0.0
        %1458 = vmatmul.mubr.f32.gmra.mxu0 %v1346
        %v1459 = vpop.f32.mrf.mxu0
        %v1460 = vadd.f32 0.0, %v1459
        %v1461 = vpop.f32.mrf.mxu0
        %1462 = vmatprep.mubr.f32.mxu0 0.0
        %1463 = vmatmul.mubr.f32.gmra.mxu0 %v1349
        %v1464 = vpop.f32.mrf.mxu0
        %v1465 = vadd.f32 0.0, %v1464
        %v1466 = vpop.f32.mrf.mxu0
        %1467 = vmatprep.mubr.f32.mxu0 0.0
        %1468 = vmatmul.mubr.f32.gmra.mxu0 %v1352
        %v1469 = vpop.f32.mrf.mxu0
        %v1470 = vadd.f32 0.0, %v1469
        %v1471 = vpop.f32.mrf.mxu0
        %1472 = vmatprep.mubr.f32.mxu0 0.0
        %1473 = vmatmul.mubr.f32.gmra.mxu0 %v1355
        %v1474 = vpop.f32.mrf.mxu0
        %v1475 = vadd.f32 0.0, %v1474
        %v1476 = vpop.f32.mrf.mxu0
        %1477 = vmatprep.mubr.f32.mxu0 0.0
        %1478 = vmatmul.mubr.f32.gmra.mxu0 %v1358
        %v1479 = vpop.f32.mrf.mxu0
        %v1480 = vadd.f32 0.0, %v1479
        %v1481 = vpop.f32.mrf.mxu0
        %1482 = vmatprep.mubr.f32.mxu0 0.0
        %1483 = vmatmul.mubr.f32.gmra.mxu0 %v1361
        %v1484 = vpop.f32.mrf.mxu0
        %v1485 = vadd.f32 0.0, %v1484
        %v1486 = vpop.f32.mrf.mxu0
        %1487 = vmatprep.mubr.f32.mxu0 0.0
        %1488 = vmatmul.mubr.f32.gmra.mxu0 %v1364
        %v1489 = vpop.f32.mrf.mxu0
        %v1490 = vadd.f32 0.0, %v1489
        %v1491 = vpop.f32.mrf.mxu0
        %1492 = vmatprep.mubr.f32.mxu0 0.0
        %1493 = vmatmul.mubr.f32.gmra.mxu0 %v1367
        %v1494 = vpop.f32.mrf.mxu0
        %v1495 = vadd.f32 0.0, %v1494
        %v1496 = vpop.f32.mrf.mxu0
        %1497 = vmatprep.mubr.f32.mxu0 0.0
        %1498 = vmatmul.mubr.f32.gmra.mxu0 %v1370
        %v1499 = vpop.f32.mrf.mxu0
        %v1500 = vadd.f32 0.0, %v1499
        %v1501 = vpop.f32.mrf.mxu0
        %1502 = vmatprep.mubr.f32.mxu0 0.0
        %1503 = vmatmul.mubr.f32.gmra.mxu0 %v1373
        %v1504 = vpop.f32.mrf.mxu0
        %v1505 = vadd.f32 0.0, %v1504
        %v1506 = vpop.f32.mrf.mxu0
        %1507 = vmatprep.mubr.f32.mxu0 0.0
        %1508 = vmatmul.mubr.f32.gmra.mxu0 %v1376
        %v1509 = vpop.f32.mrf.mxu0
        %v1510 = vadd.f32 0.0, %v1509
        %v1511 = vpop.f32.mrf.mxu0
        %1512 = vmatprep.mubr.f32.mxu0 0.0
        %1513 = vmatmul.mubr.f32.gmra.mxu0 %v1379
        %v1514 = vpop.f32.mrf.mxu0
        %v1515 = vadd.f32 0.0, %v1514
        %v1516 = vpop.f32.mrf.mxu0
        %1517 = vmatprep.mubr.f32.mxu0 0.0
        %1518 = vmatmul.mubr.f32.gmra.mxu0 %v1382
        %v1519 = vpop.f32.mrf.mxu0
        %v1520 = vadd.f32 0.0, %v1519
        %v1521 = vpop.f32.mrf.mxu0
        %1522 = vmatprep.mubr.f32.mxu0 0.0
        %1523 = vmatmul.mubr.f32.gmra.mxu0 %v1385
        %v1524 = vpop.f32.mrf.mxu0
        %v1525 = vadd.f32 0.0, %v1524
        %v1526 = vpop.f32.mrf.mxu0
        %1527 = vmatprep.mubr.f32.mxu0 0.0
        %1528 = vmatmul.mubr.f32.gmra.mxu0 %v1388
        %v1529 = vpop.f32.mrf.mxu0
        %v1530 = vadd.f32 0.0, %v1529
        %v1531 = vpop.f32.mrf.mxu0
        %1532 = vmatprep.mubr.f32.mxu0 0.0
        %1533 = vmatmul.mubr.f32.gmra.mxu0 %v1391
        %v1534 = vpop.f32.mrf.mxu0
        %v1535 = vadd.f32 0.0, %v1534
        %v1536 = vpop.f32.mrf.mxu0
        %1537 = vdwg.mxu0
        %1538 = vmatprep.subr.mxu0 0.0
        %1539 = vmatpush1.msra.mxu0 %v1535
        %1540 = vmatprep.subr.mxu0 0.0
        %1541 = vmatpush1.msra.mxu0 %v1530
        %1542 = vmatprep.subr.mxu0 0.0
        %1543 = vmatpush1.msra.mxu0 %v1525
        %1544 = vmatprep.subr.mxu0 0.0
        %1545 = vmatpush1.msra.mxu0 %v1520
        %1546 = vmatprep.subr.mxu0 0.0
        %1547 = vmatpush1.msra.mxu0 %v1515
        %1548 = vmatprep.subr.mxu0 0.0
        %1549 = vmatpush1.msra.mxu0 %v1510
        %1550 = vmatprep.subr.mxu0 0.0
        %1551 = vmatpush1.msra.mxu0 %v1505
        %1552 = vmatprep.subr.mxu0 0.0
        %1553 = vmatpush1.msra.mxu0 %v1500
        %1554 = vmatprep.subr.mxu0 0.0
        %1555 = vmatpush1.msra.mxu0 %v1495
        %1556 = vmatprep.subr.mxu0 0.0
        %1557 = vmatpush1.msra.mxu0 %v1490
        %1558 = vmatprep.subr.mxu0 0.0
        %1559 = vmatpush1.msra.mxu0 %v1485
        %1560 = vmatprep.subr.mxu0 0.0
        %1561 = vmatpush1.msra.mxu0 %v1480
        %1562 = vmatprep.subr.mxu0 0.0
        %1563 = vmatpush1.msra.mxu0 %v1475
        %1564 = vmatprep.subr.mxu0 0.0
        %1565 = vmatpush1.msra.mxu0 %v1470
        %1566 = vmatprep.subr.mxu0 0.0
        %1567 = vmatpush1.msra.mxu0 %v1465
        %1568 = vmatprep.subr.mxu0 0.0
        %1569 = vmatpush1.msra.mxu0 %v1460
        %1570 = vmatprep.subr.mxu0 0.0
        %1571 = vmatpush2.msra.mxu0 0.0
        %1572 = vmatprep.subr.mxu0 0.0
        %1573 = vmatpush2.msra.mxu0 0.0
        %1574 = vmatprep.subr.mxu0 0.0
        %1575 = vmatpush2.msra.mxu0 0.0
        %1576 = vmatprep.subr.mxu0 0.0
        %1577 = vmatpush2.msra.mxu0 0.0
        %1578 = vmatprep.subr.mxu0 0.0
        %1579 = vmatpush2.msra.mxu0 0.0
        %1580 = vmatprep.subr.mxu0 0.0
        %1581 = vmatpush2.msra.mxu0 0.0
        %1582 = vmatprep.subr.mxu0 0.0
        %1583 = vmatpush2.msra.mxu0 0.0
        %1584 = vmatprep.subr.mxu0 0.0
        %1585 = vmatpush2.msra.mxu0 0.0
        %1586 = vmatprep.subr.mxu0 0.0
        %1587 = vmatpush2.msra.mxu0 0.0
        %1588 = vmatprep.subr.mxu0 0.0
        %1589 = vmatpush2.msra.mxu0 0.0
        %1590 = vmatprep.subr.mxu0 0.0
        %1591 = vmatpush2.msra.mxu0 0.0
        %1592 = vmatprep.subr.mxu0 0.0
        %1593 = vmatpush2.msra.mxu0 0.0
        %1594 = vmatprep.subr.mxu0 0.0
        %1595 = vmatpush2.msra.mxu0 0.0
        %1596 = vmatprep.subr.mxu0 0.0
        %1597 = vmatpush2.msra.mxu0 0.0
        %1598 = vmatprep.subr.mxu0 0.0
        %1599 = vmatpush2.msra.mxu0 0.0
        %1600 = vmatprep.subr.mxu0 0.0
        %1601 = vmatpush2.msra.mxu0 0.0
        %1602 = vmatprep.mubr.f32.mxu0 0.0
        %1603 = vmatmul.mubr.f32.gmra.mxu0 %v216
        %v1604 = vpop.f32.mrf.mxu0
        %v1605 = vadd.f32 0.0, %v1604
        %v1606 = vpop.f32.mrf.mxu0
        %1607 = vmatprep.mubr.f32.mxu0 0.0
        %1608 = vmatmul.mubr.f32.gmra.mxu0 %v217
        %v1609 = vpop.f32.mrf.mxu0
        %v1610 = vadd.f32 0.0, %v1609
        %v1611 = vpop.f32.mrf.mxu0
        %1612 = vmatprep.mubr.f32.mxu0 0.0
        %1613 = vmatmul.mubr.f32.gmra.mxu0 %v218
        %v1614 = vpop.f32.mrf.mxu0
        %v1615 = vadd.f32 0.0, %v1614
        %v1616 = vpop.f32.mrf.mxu0
        %1617 = vmatprep.mubr.f32.mxu0 0.0
        %1618 = vmatmul.mubr.f32.gmra.mxu0 %v219
        %v1619 = vpop.f32.mrf.mxu0
        %v1620 = vadd.f32 0.0, %v1619
        %v1621 = vpop.f32.mrf.mxu0
        %1622 = vmatprep.mubr.f32.mxu0 0.0
        %1623 = vmatmul.mubr.f32.gmra.mxu0 %v220
        %v1624 = vpop.f32.mrf.mxu0
        %v1625 = vadd.f32 0.0, %v1624
        %v1626 = vpop.f32.mrf.mxu0
        %1627 = vmatprep.mubr.f32.mxu0 0.0
        %1628 = vmatmul.mubr.f32.gmra.mxu0 %v221
        %v1629 = vpop.f32.mrf.mxu0
        %v1630 = vadd.f32 0.0, %v1629
        %v1631 = vpop.f32.mrf.mxu0
        %1632 = vmatprep.mubr.f32.mxu0 0.0
        %1633 = vmatmul.mubr.f32.gmra.mxu0 %v222
        %v1634 = vpop.f32.mrf.mxu0
        %v1635 = vadd.f32 0.0, %v1634
        %v1636 = vpop.f32.mrf.mxu0
        %1637 = vmatprep.mubr.f32.mxu0 0.0
        %1638 = vmatmul.mubr.f32.gmra.mxu0 %v223
        %v1639 = vpop.f32.mrf.mxu0
        %v1640 = vadd.f32 0.0, %v1639
        %v1641 = vpop.f32.mrf.mxu0
        %1642 = vmatprep.mubr.f32.mxu0 0.0
        %1643 = vmatmul.mubr.f32.gmra.mxu0 %v224
        %v1644 = vpop.f32.mrf.mxu0
        %v1645 = vadd.f32 0.0, %v1644
        %v1646 = vpop.f32.mrf.mxu0
        %1647 = vmatprep.mubr.f32.mxu0 0.0
        %1648 = vmatmul.mubr.f32.gmra.mxu0 %v225
        %v1649 = vpop.f32.mrf.mxu0
        %v1650 = vadd.f32 0.0, %v1649
        %v1651 = vpop.f32.mrf.mxu0
        %1652 = vmatprep.mubr.f32.mxu0 0.0
        %1653 = vmatmul.mubr.f32.gmra.mxu0 %v226
        %v1654 = vpop.f32.mrf.mxu0
        %v1655 = vadd.f32 0.0, %v1654
        %v1656 = vpop.f32.mrf.mxu0
        %1657 = vmatprep.mubr.f32.mxu0 0.0
        %1658 = vmatmul.mubr.f32.gmra.mxu0 %v227
        %v1659 = vpop.f32.mrf.mxu0
        %v1660 = vadd.f32 0.0, %v1659
        %v1661 = vpop.f32.mrf.mxu0
        %1662 = vmatprep.mubr.f32.mxu0 0.0
        %1663 = vmatmul.mubr.f32.gmra.mxu0 %v228
        %v1664 = vpop.f32.mrf.mxu0
        %v1665 = vadd.f32 0.0, %v1664
        %v1666 = vpop.f32.mrf.mxu0
        %1667 = vmatprep.mubr.f32.mxu0 0.0
        %1668 = vmatmul.mubr.f32.gmra.mxu0 %v229
        %v1669 = vpop.f32.mrf.mxu0
        %v1670 = vadd.f32 0.0, %v1669
        %v1671 = vpop.f32.mrf.mxu0
        %1672 = vmatprep.mubr.f32.mxu0 0.0
        %1673 = vmatmul.mubr.f32.gmra.mxu0 %v230
        %v1674 = vpop.f32.mrf.mxu0
        %v1675 = vadd.f32 0.0, %v1674
        %v1676 = vpop.f32.mrf.mxu0
        %1677 = vmatprep.mubr.f32.mxu0 0.0
        %1678 = vmatmul.mubr.f32.gmra.mxu0 %v231
        %v1679 = vpop.f32.mrf.mxu0
        %v1680 = vadd.f32 0.0, %v1679
        %v1681 = vpop.f32.mrf.mxu0
        %1682 = vmatprep.mubr.f32.mxu0 0.0
        %1683 = vmatmul.mubr.f32.gmra.mxu0 %v232
        %v1684 = vpop.f32.mrf.mxu0
        %v1685 = vadd.f32 0.0, %v1684
        %v1686 = vpop.f32.mrf.mxu0
        %1687 = vdwg.mxu0
        %v1688 = vlaneseq
        %v1689 = vshrl.u32 %v1688, 7
        %v1690 = vsub.s32 0, %v1689
        %v1691 = vrot.slane %v1685, %v1690
        %v1692 = vsub.f32 %v1605, %v1691
        %v1693 = vsub.f32 %v1610, %v1691
        %v1694 = vsub.f32 %v1615, %v1691
        %v1695 = vsub.f32 %v1620, %v1691
        %v1696 = vsub.f32 %v1625, %v1691
        %v1697 = vsub.f32 %v1630, %v1691
        %v1698 = vsub.f32 %v1635, %v1691
        %v1699 = vsub.f32 %v1640, %v1691
        %v1700 = vsub.f32 %v1645, %v1691
        %v1701 = vsub.f32 %v1650, %v1691
        %v1702 = vsub.f32 %v1655, %v1691
        %v1703 = vsub.f32 %v1660, %v1691
        %v1704 = vsub.f32 %v1665, %v1691
        %v1705 = vsub.f32 %v1670, %v1691
        %v1706 = vsub.f32 %v1675, %v1691
        %v1707 = vsub.f32 %v1680, %v1691
        %v1708 = vmul.f32 %v1692, %v1692
        %v1709 = vmul.f32 %v1693, %v1693
        %v1710 = vmul.f32 %v1694, %v1694
        %v1711 = vmul.f32 %v1695, %v1695
        %v1712 = vmul.f32 %v1696, %v1696
        %v1713 = vmul.f32 %v1697, %v1697
        %v1714 = vmul.f32 %v1698, %v1698
        %v1715 = vmul.f32 %v1699, %v1699
        %v1716 = vmul.f32 %v1700, %v1700
        %v1717 = vmul.f32 %v1701, %v1701
        %v1718 = vmul.f32 %v1702, %v1702
        %v1719 = vmul.f32 %v1703, %v1703
        %v1720 = vmul.f32 %v1704, %v1704
        %v1721 = vmul.f32 %v1705, %v1705
        %v1722 = vmul.f32 %v1706, %v1706
        %v1723 = vmul.f32 %v1707, %v1707
        %1724 = vmatprep.subr.mxu0 0.0
        %1725 = vmatpush1.msra.mxu0 %v1723
        %1726 = vmatprep.subr.mxu0 0.0
        %1727 = vmatpush1.msra.mxu0 %v1722
        %1728 = vmatprep.subr.mxu0 0.0
        %1729 = vmatpush1.msra.mxu0 %v1721
        %1730 = vmatprep.subr.mxu0 0.0
        %1731 = vmatpush1.msra.mxu0 %v1720
        %1732 = vmatprep.subr.mxu0 0.0
        %1733 = vmatpush1.msra.mxu0 %v1719
        %1734 = vmatprep.subr.mxu0 0.0
        %1735 = vmatpush1.msra.mxu0 %v1718
        %1736 = vmatprep.subr.mxu0 0.0
        %1737 = vmatpush1.msra.mxu0 %v1717
        %1738 = vmatprep.subr.mxu0 0.0
        %1739 = vmatpush1.msra.mxu0 %v1716
        %1740 = vmatprep.subr.mxu0 0.0
        %1741 = vmatpush1.msra.mxu0 %v1715
        %1742 = vmatprep.subr.mxu0 0.0
        %1743 = vmatpush1.msra.mxu0 %v1714
        %1744 = vmatprep.subr.mxu0 0.0
        %1745 = vmatpush1.msra.mxu0 %v1713
        %1746 = vmatprep.subr.mxu0 0.0
        %1747 = vmatpush1.msra.mxu0 %v1712
        %1748 = vmatprep.subr.mxu0 0.0
        %1749 = vmatpush1.msra.mxu0 %v1711
        %1750 = vmatprep.subr.mxu0 0.0
        %1751 = vmatpush1.msra.mxu0 %v1710
        %1752 = vmatprep.subr.mxu0 0.0
        %1753 = vmatpush1.msra.mxu0 %v1709
        %1754 = vmatprep.subr.mxu0 0.0
        %1755 = vmatpush1.msra.mxu0 %v1708
        %1756 = vmatprep.subr.mxu0 0.0
        %1757 = vmatpush2.msra.mxu0 0.0
        %1758 = vmatprep.subr.mxu0 0.0
        %1759 = vmatpush2.msra.mxu0 0.0
        %1760 = vmatprep.subr.mxu0 0.0
        %1761 = vmatpush2.msra.mxu0 0.0
        %1762 = vmatprep.subr.mxu0 0.0
        %1763 = vmatpush2.msra.mxu0 0.0
        %1764 = vmatprep.subr.mxu0 0.0
        %1765 = vmatpush2.msra.mxu0 0.0
        %1766 = vmatprep.subr.mxu0 0.0
        %1767 = vmatpush2.msra.mxu0 0.0
        %1768 = vmatprep.subr.mxu0 0.0
        %1769 = vmatpush2.msra.mxu0 0.0
        %1770 = vmatprep.subr.mxu0 0.0
        %1771 = vmatpush2.msra.mxu0 0.0
        %1772 = vmatprep.subr.mxu0 0.0
        %1773 = vmatpush2.msra.mxu0 0.0
        %1774 = vmatprep.subr.mxu0 0.0
        %1775 = vmatpush2.msra.mxu0 0.0
        %1776 = vmatprep.subr.mxu0 0.0
        %1777 = vmatpush2.msra.mxu0 0.0
        %1778 = vmatprep.subr.mxu0 0.0
        %1779 = vmatpush2.msra.mxu0 0.0
        %1780 = vmatprep.subr.mxu0 0.0
        %1781 = vmatpush2.msra.mxu0 0.0
        %1782 = vmatprep.subr.mxu0 0.0
        %1783 = vmatpush2.msra.mxu0 0.0
        %1784 = vmatprep.subr.mxu0 0.0
        %1785 = vmatpush2.msra.mxu0 0.0
        %1786 = vmatprep.subr.mxu0 0.0
        %1787 = vmatpush2.msra.mxu0 0.0
        %1788 = vmatprep.mubr.f32.mxu0 0.0
        %1789 = vmatmul.mubr.f32.gmra.mxu0 0.0078125
        %v1790 = vpop.f32.mrf.mxu0
        %v1791 = vadd.f32 1e-05, %v1790
        %v1792 = vpop.f32.mrf.mxu0
        %1793 = vdwg.mxu0
        %v1794 = vrsqrt.pop %v1791
        %v1795 = vlaneseq
        %v1796 = vshrl.u32 %v1795, 7
        %v1797 = vsub.s32 0, %v1796
        %v1798 = vrot.slane %v1794, %v1797
        %v1799 = vmul.f32 %v1692, %v1798
        %v1800 = vmul.f32 %v1693, %v1798
        %v1801 = vmul.f32 %v1694, %v1798
        %v1802 = vmul.f32 %v1695, %v1798
        %v1803 = vmul.f32 %v1696, %v1798
        %v1804 = vmul.f32 %v1697, %v1798
        %v1805 = vmul.f32 %v1698, %v1798
        %v1806 = vmul.f32 %v1699, %v1798
        %v1807 = vmul.f32 %v1700, %v1798
        %v1808 = vmul.f32 %v1701, %v1798
        %v1809 = vmul.f32 %v1702, %v1798
        %v1810 = vmul.f32 %v1703, %v1798
        %v1811 = vmul.f32 %v1704, %v1798
        %v1812 = vmul.f32 %v1705, %v1798
        %v1813 = vmul.f32 %v1706, %v1798
        %v1814 = vmul.f32 %v1707, %v1798
        %v1815 = vlaneseq
        %v1816 = vshrl.u32 %v1815, 7
        %v1817 = vsub.s32 4, %v1816
        %v1818 = vrot.slane %v233, %v1817
        %v1819 = vmul.f32 %v1799, %v1818
        %v1820 = vmul.f32 %v1800, %v1818
        %v1821 = vmul.f32 %v1801, %v1818
        %v1822 = vmul.f32 %v1802, %v1818
        %v1823 = vmul.f32 %v1803, %v1818
        %v1824 = vmul.f32 %v1804, %v1818
        %v1825 = vmul.f32 %v1805, %v1818
        %v1826 = vmul.f32 %v1806, %v1818
        %v1827 = vmul.f32 %v1807, %v1818
        %v1828 = vmul.f32 %v1808, %v1818
        %v1829 = vmul.f32 %v1809, %v1818
        %v1830 = vmul.f32 %v1810, %v1818
        %v1831 = vmul.f32 %v1811, %v1818
        %v1832 = vmul.f32 %v1812, %v1818
        %v1833 = vmul.f32 %v1813, %v1818
        %v1834 = vmul.f32 %v1814, %v1818
        %v1835 = vlaneseq
        %v1836 = vshrl.u32 %v1835, 7
        %v1837 = vsub.s32 5, %v1836
        %v1838 = vrot.slane %v233, %v1837
        %v1839 = vadd.f32 %v1819, %v1838
        %v1840 = vadd.f32 %v1820, %v1838
        %v1841 = vadd.f32 %v1821, %v1838
        %v1842 = vadd.f32 %v1822, %v1838
        %v1843 = vadd.f32 %v1823, %v1838
        %v1844 = vadd.f32 %v1824, %v1838
        %v1845 = vadd.f32 %v1825, %v1838
        %v1846 = vadd.f32 %v1826, %v1838
        %v1847 = vadd.f32 %v1827, %v1838
        %v1848 = vadd.f32 %v1828, %v1838
        %v1849 = vadd.f32 %v1829, %v1838
        %v1850 = vadd.f32 %v1830, %v1838
        %v1851 = vadd.f32 %v1831, %v1838
        %v1852 = vadd.f32 %v1832, %v1838
        %v1853 = vadd.f32 %v1833, %v1838
        %v1854 = vadd.f32 %v1834, %v1838
        %v1855 = vmax.f32 %v1839, 0.0
        %v1856 = vmax.f32 %v1840, 0.0
        %v1857 = vmax.f32 %v1841, 0.0
        %v1858 = vmax.f32 %v1842, 0.0
        %v1859 = vmax.f32 %v1843, 0.0
        %v1860 = vmax.f32 %v1844, 0.0
        %v1861 = vmax.f32 %v1845, 0.0
        %v1862 = vmax.f32 %v1846, 0.0
        %v1863 = vmax.f32 %v1847, 0.0
        %v1864 = vmax.f32 %v1848, 0.0
        %v1865 = vmax.f32 %v1849, 0.0
        %v1866 = vmax.f32 %v1850, 0.0
        %v1867 = vmax.f32 %v1851, 0.0
        %v1868 = vmax.f32 %v1852, 0.0
        %v1869 = vmax.f32 %v1853, 0.0
        %v1870 = vmax.f32 %v1854, 0.0
        %v1871 = vld [vmem:[%s215 + $0x88] sm:$0xff]
        %1872 = vmatprep.subr.mxu0 0.0
        %1873 = vmatpush1.msra.mxu0 %v1870
        %1874 = vmatprep.subr.mxu0 0.0
        %1875 = vmatpush1.msra.mxu0 %v1869
        %1876 = vmatprep.subr.mxu0 0.0
        %1877 = vmatpush1.msra.mxu0 %v1868
        %1878 = vmatprep.subr.mxu0 0.0
        %1879 = vmatpush1.msra.mxu0 %v1867
        %1880 = vmatprep.subr.mxu0 0.0
        %1881 = vmatpush1.msra.mxu0 %v1866
        %1882 = vmatprep.subr.mxu0 0.0
        %1883 = vmatpush1.msra.mxu0 %v1865
        %1884 = vmatprep.subr.mxu0 0.0
        %1885 = vmatpush1.msra.mxu0 %v1864
        %1886 = vmatprep.subr.mxu0 0.0
        %1887 = vmatpush1.msra.mxu0 %v1863
        %1888 = vmatprep.subr.mxu0 0.0
        %1889 = vmatpush1.msra.mxu0 %v1862
        %1890 = vmatprep.subr.mxu0 0.0
        %1891 = vmatpush1.msra.mxu0 %v1861
        %1892 = vmatprep.subr.mxu0 0.0
        %1893 = vmatpush1.msra.mxu0 %v1860
        %1894 = vmatprep.subr.mxu0 0.0
        %1895 = vmatpush1.msra.mxu0 %v1859
        %1896 = vmatprep.subr.mxu0 0.0
        %1897 = vmatpush1.msra.mxu0 %v1858
        %1898 = vmatprep.subr.mxu0 0.0
        %1899 = vmatpush1.msra.mxu0 %v1857
        %1900 = vmatprep.subr.mxu0 0.0
        %1901 = vmatpush1.msra.mxu0 %v1856
        %1902 = vmatprep.subr.mxu0 0.0
        %1903 = vmatpush1.msra.mxu0 %v1855
        %1904 = vmatprep.subr.mxu0 0.0
        %1905 = vmatpush2.msra.mxu0 0.0
        %1906 = vmatprep.subr.mxu0 0.0
        %1907 = vmatpush2.msra.mxu0 0.0
        %1908 = vmatprep.subr.mxu0 0.0
        %1909 = vmatpush2.msra.mxu0 0.0
        %1910 = vmatprep.subr.mxu0 0.0
        %1911 = vmatpush2.msra.mxu0 0.0
        %1912 = vmatprep.subr.mxu0 0.0
        %1913 = vmatpush2.msra.mxu0 0.0
        %1914 = vmatprep.subr.mxu0 0.0
        %1915 = vmatpush2.msra.mxu0 0.0
        %1916 = vmatprep.subr.mxu0 0.0
        %1917 = vmatpush2.msra.mxu0 0.0
        %1918 = vmatprep.subr.mxu0 0.0
        %1919 = vmatpush2.msra.mxu0 0.0
        %1920 = vmatprep.subr.mxu0 0.0
        %1921 = vmatpush2.msra.mxu0 0.0
        %1922 = vmatprep.subr.mxu0 0.0
        %1923 = vmatpush2.msra.mxu0 0.0
        %1924 = vmatprep.subr.mxu0 0.0
        %1925 = vmatpush2.msra.mxu0 0.0
        %1926 = vmatprep.subr.mxu0 0.0
        %1927 = vmatpush2.msra.mxu0 0.0
        %1928 = vmatprep.subr.mxu0 0.0
        %1929 = vmatpush2.msra.mxu0 0.0
        %1930 = vmatprep.subr.mxu0 0.0
        %1931 = vmatpush2.msra.mxu0 0.0
        %1932 = vmatprep.subr.mxu0 0.0
        %1933 = vmatpush2.msra.mxu0 0.0
        %1934 = vmatprep.subr.mxu0 0.0
        %1935 = vmatpush2.msra.mxu0 0.0
        %1936 = vmatprep.mubr.f32.mxu0 0.0
        %1937 = vmatmul.mubr.f32.gmra.mxu0 %v1871
        %v1938 = vpop.f32.mrf.mxu0
        %v1939 = vadd.f32 0.0, %v1938
        %v1940 = vpop.f32.mrf.mxu0
        %1941 = vdwg.mxu0
        %v1942 = vld [vmem:[%s2 + $0xc8] sm:$0xff]
        %v1943 = vld [vmem:[%s2 + $0xd0] sm:$0xff]
        %v1944 = vld [vmem:[%s2 + $0xd8] sm:$0xff]
        %v1945 = vld [vmem:[%s2 + $0xe0] sm:$0xff]
        %v1946 = vlaneseq
        %v1947 = vshrl.u32 %v1946, 7
        %v1948 = vsub.s32 6, %v1947
        %v1949 = vrot.slane %v233, %v1948
        %v1951 = vsel %vm814, %v1939, 0
        %1953 = vmatprep.subr.mxu0 0.0
        %1954 = vmatpush1.msra.mxu0 0.0
        %1955 = vmatprep.subr.mxu0 0.0
        %1956 = vmatpush1.msra.mxu0 0.0
        %1957 = vmatprep.subr.mxu0 0.0
        %1958 = vmatpush1.msra.mxu0 0.0
        %1959 = vmatprep.subr.mxu0 0.0
        %1960 = vmatpush1.msra.mxu0 0.0
        %1961 = vmatprep.subr.mxu0 0.0
        %1962 = vmatpush1.msra.mxu0 0.0
        %1963 = vmatprep.subr.mxu0 0.0
        %1964 = vmatpush1.msra.mxu0 0.0
        %1965 = vmatprep.subr.mxu0 0.0
        %1966 = vmatpush1.msra.mxu0 0.0
        %1967 = vmatprep.subr.mxu0 0.0
        %1968 = vmatpush1.msra.mxu0 0.0
        %1969 = vmatprep.subr.mxu0 0.0
        %1970 = vmatpush1.msra.mxu0 0.0
        %1971 = vmatprep.subr.mxu0 0.0
        %1972 = vmatpush1.msra.mxu0 0.0
        %1973 = vmatprep.subr.mxu0 0.0
        %1974 = vmatpush1.msra.mxu0 0.0
        %1975 = vmatprep.subr.mxu0 0.0
        %1976 = vmatpush1.msra.mxu0 0.0
        %1977 = vmatprep.subr.mxu0 0.0
        %1978 = vmatpush1.msra.mxu0 %v1945
        %1979 = vmatprep.subr.mxu0 0.0
        %1980 = vmatpush1.msra.mxu0 %v1944
        %1981 = vmatprep.subr.mxu0 0.0
        %1982 = vmatpush1.msra.mxu0 %v1943
        %1983 = vmatprep.subr.mxu0 0.0
        %1984 = vmatpush1.msra.mxu0 %v1942
        %1985 = vmatprep.subr.mxu0 0.0
        %1986 = vmatpush2.msra.mxu0 0.0
        %1987 = vmatprep.subr.mxu0 0.0
        %1988 = vmatpush2.msra.mxu0 0.0
        %1989 = vmatprep.subr.mxu0 0.0
        %1990 = vmatpush2.msra.mxu0 0.0
        %1991 = vmatprep.subr.mxu0 0.0
        %1992 = vmatpush2.msra.mxu0 0.0
        %1993 = vmatprep.subr.mxu0 0.0
        %1994 = vmatpush2.msra.mxu0 0.0
        %1995 = vmatprep.subr.mxu0 0.0
        %1996 = vmatpush2.msra.mxu0 0.0
        %1997 = vmatprep.subr.mxu0 0.0
        %1998 = vmatpush2.msra.mxu0 0.0
        %1999 = vmatprep.subr.mxu0 0.0
        %2000 = vmatpush2.msra.mxu0 0.0
        %2001 = vmatprep.subr.mxu0 0.0
        %2002 = vmatpush2.msra.mxu0 0.0
        %2003 = vmatprep.subr.mxu0 0.0
        %2004 = vmatpush2.msra.mxu0 0.0
        %2005 = vmatprep.subr.mxu0 0.0
        %2006 = vmatpush2.msra.mxu0 0.0
        %2007 = vmatprep.subr.mxu0 0.0
        %2008 = vmatpush2.msra.mxu0 0.0
        %2009 = vmatprep.subr.mxu0 0.0
        %2010 = vmatpush2.msra.mxu0 0.0
        %2011 = vmatprep.subr.mxu0 0.0
        %2012 = vmatpush2.msra.mxu0 0.0
        %2013 = vmatprep.subr.mxu0 0.0
        %2014 = vmatpush2.msra.mxu0 0.0
        %2015 = vmatprep.subr.mxu0 0.0
        %2016 = vmatpush2.msra.mxu0 0.0
        %2017 = vmatprep.mubr.f32.mxu0 0.0
        %2018 = vmatmul.mubr.f32.gmra.mxu0 %v1951
        %v2019 = vpop.f32.mrf.mxu0
        %v2020 = vadd.f32 %v1949, %v2019
        %v2021 = vpop.f32.mrf.mxu0
        %2022 = vdwg.mxu0
        %2023 = vst.msk [vmem:[%s205] sm:$0xff] %vm814, %v2020
        %s2024 = sand.u32 %s120, 1
        %s2025 = scalar_lea.sflag [#allocation3], %s2024
        %s2026 = sand.u32 %s120, 1
        %s2027 = smul.addr %s2026, 8
        %s2028 = scalar_lea.vmem [#allocation2], %s2027
        // Predicated region
        $region37: #{tpu_custom_call.1} parent=35 // pred_check
          %p2029 = pneg %p130
        $region38: #{tpu_custom_call.1} parent=35 // pred_check_branch
          %2031 = sbr.rel (%p2029) target = $region40
        $region39: #{tpu_custom_call.1} parent=35 // pred_region
          %s2033 = ssub.s32 128, 128
          %2034 = vsyncadd %s2025, %s2033
          %s2035 = smul.addr %s18, 128
          %s2036 = scalar_lea.hbm %s4, %s2035
          %s2038 = sshll.u32 %s2028, 4
          %s2039 = int_to_ptr.vmem [resolvable:$true] %s2038
          %2041 = dma.vmem_to_hbm [thread:$0]  %s2039, 128, %s2036, %s2025
        $region40: #{tpu_custom_call.1} parent=35 // pred_fallthru
          _
      $region36: #{tpu_custom_call.1} parent=5 // pred_fallthru
        _
      %p2042 = scmp.le.s32.totalorder 2, %s13
      // Predicated region
      $region41: #{tpu_custom_call.1} parent=5 // pred_check
        %p2043 = pneg %p2042
      $region42: #{tpu_custom_call.1} parent=5 // pred_check_branch
        %2045 = sbr.rel (%p2043) target = $region44
      $region43: #{tpu_custom_call.1} parent=5 // pred_region
        %s2046 = ssub.s32 %s13, 2
        // Predicated region
        $region45: #{tpu_custom_call.1} parent=43 // pred_check
          %p2047 = pneg %p136
        $region46: #{tpu_custom_call.1} parent=43 // pred_check_branch
          %2049 = sbr.rel (%p2047) target = $region48
        $region47: #{tpu_custom_call.1} parent=43 // pred_region
          %s2050 = sand.u32 %s121, 1
          %s2051 = scalar_lea.sflag [#allocation3], %s2050
          %s2052 = sand.u32 %s121, 1
          %s2053 = smul.addr %s2052, 8
          %s2054 = scalar_lea.vmem [#allocation2], %s2053
          %2055 = dma.done %s2051, 128
        $region48: #{tpu_custom_call.1} parent=43 // pred_fallthru
          _
      $region44: #{tpu_custom_call.1} parent=5 // pred_fallthru
        _
    $region6: #{tpu_custom_call.1} parent=1 // loop_footer
      %s17 = sadd.s32 1, %s13
    $region7: #{tpu_custom_call.1} parent=1 // loop_footer_branch
      %12 = sbr.rel target = $region3
    $region8: #{tpu_custom_call.1} parent=1 // loop_exit
      _
    %2056 = vsyncpa [#allocation3], 1
    %s2057 = scalar_lea.sflag [#allocation3], 1
    %2058 = vsyncpa %s2057, 1

</llo_original>
